<compile_context>
chip_gen: v7x
topology: tpu7x:2x2x1
jax: 0.10.0
libtpu: 0.0.40
codegen_flags: <defaults>
</compile_context>

<pallas_src>
import math
import functools

import jax
import jax.numpy as jnp
import numpy as np
from jax.experimental import pallas as pl
from jax.experimental.pallas import tpu as pltpu

HIDDEN = 32
NUM_HEADS = 4
HEAD_DIM = HIDDEN // NUM_HEADS
B = 2
S = 8


# ------------------------------ Fused kernel ---------------------------------
def _fused_attn_kernel(x_ref, wqkv_ref, bqkv_ref, wout_ref, bout_ref, mask_ref,
                       o_ref, *, seq, num_heads, head_dim):
    hidden = num_heads * head_dim
    alpha = 32.0

    # QKV projection for this batch block.  Q columns of wqkv/bqkv already
    # carry 1/sqrt(head_dim) (folded in at parameter-prep time).
    qkv = jnp.dot(x_ref[...], wqkv_ref[...],
                  preferred_element_type=jnp.float32) + bqkv_ref[...]   # [S, 3H]

    # Head-batched q/k/v stacks [nh, S, dh] -- registers only, no VMEM scratch.
    def stack_heads(base):
        return jnp.stack(
            [qkv[:, base + h * head_dim: base + (h + 1) * head_dim]
             for h in range(num_heads)], axis=0)

    q = stack_heads(0)
    k = stack_heads(hidden)
    v = stack_heads(2 * hidden)

    # scores[h, q, k] = (q / sqrt(dh)) . k, batched over heads (no explicit k.T).
    scores = jnp.einsum('hqd,hkd->hqk', q, k,
                        preferred_element_type=jnp.float32)             # [nh,S,S]

    # mask * scores - (1 - mask) * 10000, mask broadcast over heads.
    m = mask_ref[0]                                                     # [S, S]
    scores = m[None] * scores - ((1.0 - m) * 10000.0)[None]

    # CogView PB-relax: subtract per-(batch, head) max of scores / alpha.
    scaled = scores * (1.0 / alpha)
    smax = jnp.max(scaled, axis=-1, keepdims=True)
    smax = jnp.max(smax, axis=-2, keepdims=True)                        # [nh,1,1]
    scores = (scaled - smax) * alpha

    # Softmax over keys (all f32 VPU/EUP math).
    row_max = jnp.max(scores, axis=-1, keepdims=True)
    e = jnp.exp(scores - row_max)
    probs = e / jnp.sum(e, axis=-1, keepdims=True)
    # attn_drop with p = 0.0 -> identity (eval semantics).

    # ctx[h, q, d] = probs @ v, batched over heads.
    ctx = jnp.einsum('hqk,hkd->hqd', probs, v,
                     preferred_element_type=jnp.float32)                # [nh,S,dh]

    # Merge heads along the lane axis (register concat, no VMEM round-trip).
    ctx2d = jnp.concatenate([ctx[h] for h in range(num_heads)], axis=-1)  # [S, H]

    # Output projection.
    out = jnp.dot(ctx2d, wout_ref[...],
                  preferred_element_type=jnp.float32) + bout_ref[...]   # [S, H]
    # out_drop with p = 0.0 -> identity (eval semantics).

    # Lane-dense store: pack contiguous row groups along the lane axis so the
    # output block is a full 128-lane slab (unmasked vst) instead of a 32-lane
    # masked store.  slab[i, p*H + c] == out[p*rows_per_piece + i, c].
    n_pieces = 128 // hidden
    rows_per_piece = seq // n_pieces
    slab = jnp.concatenate(
        [out[p * rows_per_piece:(p + 1) * rows_per_piece, :]
         for p in range(n_pieces)], axis=-1)                 # [rows_per_piece,128]
    o_ref[0] = slab.astype(o_ref.dtype)


# ------------------------------ Wrappers --------------------------------------
def prepare_params(params):
    """Fold 1/sqrt(head_dim) into the Q columns of wqkv/bqkv (done once)."""
    wqkv, bqkv, wout, bout = params
    hidden = wout.shape[0]
    inv_d = 1.0 / math.sqrt(hidden // NUM_HEADS)
    scale = jnp.concatenate([
        jnp.full((hidden,), inv_d, dtype=wqkv.dtype),
        jnp.ones((2 * hidden,), dtype=wqkv.dtype)])
    return (wqkv * scale[None, :], bqkv * scale[None, :], wout, bout)


def self_attention_forward(x, mask, prepared_params):
    """x: [B, S, H], mask: [B, 1, S, S] (1=keep). Returns (out [B, S, H], None)."""
    # TODO(synk): use_cache / KV-cache concat, the rudalle_relax branch and
    # dropout with p > 0 (training mode) are not implemented.
    wqkv, bqkv, wout, bout = prepared_params
    B_, S_, H = x.shape
    nh = NUM_HEADS
    dh = H // nh

    # Lane-dense output packing parameters (holds for H=32, S=8).
    assert 128 % H == 0 and (S_ * H) % 128 == 0
    n_pieces = 128 // H
    rpp = S_ // n_pieces                       # slab rows per batch

    x2d = x.reshape(B_ * S_, H)
    mask3d = mask[:, 0, -S_:, :].astype(x.dtype)   # [B, S, S]

    kernel = functools.partial(
        _fused_attn_kernel, seq=S_, num_heads=nh, head_dim=dh)

    out_packed = pl.pallas_call(
        kernel,
        out_shape=jax.ShapeDtypeStruct((B_, rpp, 128), x.dtype),
        grid=(B_,),
        in_specs=[
            pl.BlockSpec((S_, H), lambda b: (b, 0)),          # x rows of batch b
            pl.BlockSpec((H, 3 * H), lambda b: (0, 0)),       # wqkv (Q pre-scaled)
            pl.BlockSpec((1, 3 * H), lambda b: (0, 0)),       # bqkv (Q pre-scaled)
            pl.BlockSpec((H, H), lambda b: (0, 0)),           # wout
            pl.BlockSpec((1, H), lambda b: (0, 0)),           # bout
            pl.BlockSpec((1, S_, S_), lambda b: (b, 0, 0)),   # mask
        ],
        out_specs=pl.BlockSpec((1, rpp, 128), lambda b: (b, 0, 0)),
        compiler_params=pltpu.CompilerParams(
            dimension_semantics=("parallel",)),               # batch across TCs (v7x)
    )(x2d, wqkv, bqkv, wout, bout, mask3d)

    # Undo the lane-dense packing: slab[b, i, p*H + c] == out[b, p*rpp + i, c].
    out = (out_packed.reshape(B_, rpp, n_pieces, H)
           .transpose(0, 2, 1, 3)
           .reshape(B_, S_, H))
    return out, None


# ------------------------------ Pure-JAX reference ---------------------------
def reference_forward(x, mask, params):
    wqkv, bqkv, wout, bout = params
    d = math.sqrt(HEAD_DIM)
    qkv = x @ wqkv + bqkv[0]
    q, k, v = jnp.split(qkv, 3, axis=-1)

    def split_heads(t):
        return t.reshape(B, S, NUM_HEADS, HEAD_DIM).transpose(0, 2, 1, 3)

    q, k, v = split_heads(q), split_heads(k), split_heads(v)
    scores = jnp.einsum("bhqd,bhkd->bhqk", q / d, k)
    scores = mask * scores - (1.0 - mask) * 10000.0
    alpha = 32.0
    scaled = scores / alpha
    smax = jnp.max(scaled.reshape(B, NUM_HEADS, -1), axis=-1)[..., None, None]
    scores = (scaled - smax) * alpha
    probs = jax.nn.softmax(scores, axis=-1)
    ctx = jnp.einsum("bhqk,bhkd->bhqd", probs, v)
    ctx = ctx.transpose(0, 2, 1, 3).reshape(B, S, HIDDEN)
    return ctx @ wout + bout[0]


if __name__ == "__main__":
    key = jax.random.PRNGKey(0)
    kx, kw1, kb1, kw2, kb2 = jax.random.split(key, 5)

    x = jax.random.normal(kx, (B, S, HIDDEN), dtype=jnp.float32)

    # Deterministic parameter init (nn.Linear shapes; stored already transposed
    # so that y = x @ W + b matches PyTorch's x @ weight.T + bias).
    wqkv = jax.random.normal(kw1, (HIDDEN, 3 * HIDDEN), dtype=jnp.float32) * 0.05
    bqkv = jax.random.normal(kb1, (1, 3 * HIDDEN), dtype=jnp.float32) * 0.05
    wout = jax.random.normal(kw2, (HIDDEN, HIDDEN), dtype=jnp.float32) * 0.05
    bout = jax.random.normal(kb2, (1, HIDDEN), dtype=jnp.float32) * 0.05
    params = (wqkv, bqkv, wout, bout)

    # Causal mask [B, 1, S, S] (1 = attend, 0 = masked).
    mask = jnp.tril(jnp.ones((S, S), dtype=jnp.float32))[None, None]
    mask = jnp.broadcast_to(mask, (B, 1, S, S))

    # One-time parameter prep (folds 1/sqrt(head_dim) into the Q projection).
    prepared = prepare_params(params)

    out, cache = self_attention_forward(x, mask, prepared)
    out = jax.block_until_ready(out)

    ref = reference_forward(x, mask, params)
    np.testing.assert_allclose(np.asarray(out), np.asarray(ref), rtol=1e-5, atol=1e-5)

    print("KERNEL_OK")
</pallas_src>

<mosaic_0001>
module attributes {stable_mosaic.version = 11 : i64} {
  func.func @_fused_attn_kernel(%arg0: i32, %arg1: memref<8x32xf32, #tpu.memory_space<vmem>>, %arg2: memref<32x96xf32, #tpu.memory_space<vmem>>, %arg3: memref<1x96xf32, #tpu.memory_space<vmem>>, %arg4: memref<32x32xf32, #tpu.memory_space<vmem>>, %arg5: memref<1x32xf32, #tpu.memory_space<vmem>>, %arg6: memref<1x8x8xf32, #tpu.memory_space<vmem>>, %arg7: memref<1x2x128xf32, #tpu.memory_space<vmem>>) attributes {dimension_semantics = [#tpu.dimension_semantics<parallel>], iteration_bounds = array<i64: 2>, scalar_prefetch = 0 : i64, scratch_operands = 0 : i64, tpu.core_type = #tpu.core_type<tc>, window_params = [{transform_indices = @transform_0, window_bounds = array<i64: 8, 32>}, {pipeline_mode = #tpu.pipeline_mode<synchronous>, transform_indices = @transform_1, window_bounds = array<i64: 32, 96>}, {pipeline_mode = #tpu.pipeline_mode<synchronous>, transform_indices = @transform_2, window_bounds = array<i64: 1, 96>}, {pipeline_mode = #tpu.pipeline_mode<synchronous>, transform_indices = @transform_3, window_bounds = array<i64: 32, 32>}, {pipeline_mode = #tpu.pipeline_mode<synchronous>, transform_indices = @transform_4, window_bounds = array<i64: 1, 32>}, {transform_indices = @transform_5, window_bounds = array<i64: 1, 8, 8>}, {transform_indices = @transform_6, window_bounds = array<i64: 1, 2, 128>}]} {
    %c0 = arith.constant 0 : index
    %c0_0 = arith.constant 0 : index
    %0 = vector.load %arg1[%c0, %c0_0] : memref<8x32xf32, #tpu.memory_space<vmem>>, vector<8x32xf32>
    %c0_1 = arith.constant 0 : index
    %c0_2 = arith.constant 0 : index
    %1 = vector.load %arg2[%c0_1, %c0_2] : memref<32x96xf32, #tpu.memory_space<vmem>>, vector<32x96xf32>
    %cst = arith.constant dense<0.000000e+00> : vector<8x96xf32>
    %2 = tpu.matmul %0, %1, %cst {dimension_numbers = #tpu.dot_dimension_numbers<[1], [0], [0], [1], [0, 0, 1, 1], [], []>} : vector<8x32xf32>, vector<32x96xf32>, vector<8x96xf32> -> vector<8x96xf32>
    %c0_3 = arith.constant 0 : index
    %c0_4 = arith.constant 0 : index
    %3 = vector.load %arg3[%c0_3, %c0_4] : memref<1x96xf32, #tpu.memory_space<vmem>>, vector<1x96xf32>
    %4 = vector.broadcast %3 : vector<1x96xf32> to vector<8x96xf32>
    %5 = arith.addf %2, %4 : vector<8x96xf32>
    %6 = vector.extract_strided_slice %5 {offsets = [0, 0], sizes = [8, 8], strides = [1, 1]} : vector<8x96xf32> to vector<8x8xf32>
    %7 = vector.extract_strided_slice %5 {offsets = [0, 8], sizes = [8, 8], strides = [1, 1]} : vector<8x96xf32> to vector<8x8xf32>
    %8 = vector.extract_strided_slice %5 {offsets = [0, 16], sizes = [8, 8], strides = [1, 1]} : vector<8x96xf32> to vector<8x8xf32>
    %9 = vector.extract_strided_slice %5 {offsets = [0, 24], sizes = [8, 8], strides = [1, 1]} : vector<8x96xf32> to vector<8x8xf32>
    %10 = vector.shape_cast %6 : vector<8x8xf32> to vector<1x8x8xf32>
    %11 = vector.shape_cast %7 : vector<8x8xf32> to vector<1x8x8xf32>
    %12 = vector.shape_cast %8 : vector<8x8xf32> to vector<1x8x8xf32>
    %13 = vector.shape_cast %9 : vector<8x8xf32> to vector<1x8x8xf32>
    %14 = tpu.concatenate %10, %11, %12, %13 in 0 : vector<1x8x8xf32>, vector<1x8x8xf32>, vector<1x8x8xf32>, vector<1x8x8xf32> -> vector<4x8x8xf32>
    %15 = vector.extract_strided_slice %5 {offsets = [0, 32], sizes = [8, 8], strides = [1, 1]} : vector<8x96xf32> to vector<8x8xf32>
    %16 = vector.extract_strided_slice %5 {offsets = [0, 40], sizes = [8, 8], strides = [1, 1]} : vector<8x96xf32> to vector<8x8xf32>
    %17 = vector.extract_strided_slice %5 {offsets = [0, 48], sizes = [8, 8], strides = [1, 1]} : vector<8x96xf32> to vector<8x8xf32>
    %18 = vector.extract_strided_slice %5 {offsets = [0, 56], sizes = [8, 8], strides = [1, 1]} : vector<8x96xf32> to vector<8x8xf32>
    %19 = vector.shape_cast %15 : vector<8x8xf32> to vector<1x8x8xf32>
    %20 = vector.shape_cast %16 : vector<8x8xf32> to vector<1x8x8xf32>
    %21 = vector.shape_cast %17 : vector<8x8xf32> to vector<1x8x8xf32>
    %22 = vector.shape_cast %18 : vector<8x8xf32> to vector<1x8x8xf32>
    %23 = tpu.concatenate %19, %20, %21, %22 in 0 : vector<1x8x8xf32>, vector<1x8x8xf32>, vector<1x8x8xf32>, vector<1x8x8xf32> -> vector<4x8x8xf32>
    %24 = vector.extract_strided_slice %5 {offsets = [0, 64], sizes = [8, 8], strides = [1, 1]} : vector<8x96xf32> to vector<8x8xf32>
    %25 = vector.extract_strided_slice %5 {offsets = [0, 72], sizes = [8, 8], strides = [1, 1]} : vector<8x96xf32> to vector<8x8xf32>
    %26 = vector.extract_strided_slice %5 {offsets = [0, 80], sizes = [8, 8], strides = [1, 1]} : vector<8x96xf32> to vector<8x8xf32>
    %27 = vector.extract_strided_slice %5 {offsets = [0, 88], sizes = [8, 8], strides = [1, 1]} : vector<8x96xf32> to vector<8x8xf32>
    %28 = vector.shape_cast %24 : vector<8x8xf32> to vector<1x8x8xf32>
    %29 = vector.shape_cast %25 : vector<8x8xf32> to vector<1x8x8xf32>
    %30 = vector.shape_cast %26 : vector<8x8xf32> to vector<1x8x8xf32>
    %31 = vector.shape_cast %27 : vector<8x8xf32> to vector<1x8x8xf32>
    %32 = tpu.concatenate %28, %29, %30, %31 in 0 : vector<1x8x8xf32>, vector<1x8x8xf32>, vector<1x8x8xf32>, vector<1x8x8xf32> -> vector<4x8x8xf32>
    "tpu.trace_start"() <{level = 10 : i32, message = "hqd,hkd->hqk"}> : () -> ()
    %cst_5 = arith.constant dense<0.000000e+00> : vector<4x8x8xf32>
    %33 = tpu.matmul %14, %23, %cst_5 {dimension_numbers = #tpu.dot_dimension_numbers<[2], [2], [1], [1], [0, 0, 0, 1, 1, 1], [0], [0]>} : vector<4x8x8xf32>, vector<4x8x8xf32>, vector<4x8x8xf32> -> vector<4x8x8xf32>
    "tpu.trace_stop"() : () -> ()
    %c0_6 = arith.constant 0 : index
    %c0_7 = arith.constant 0 : index
    %c0_8 = arith.constant 0 : index
    %34 = vector.load %arg6[%c0_6, %c0_7, %c0_8] : memref<1x8x8xf32, #tpu.memory_space<vmem>>, vector<1x8x8xf32>
    %35 = vector.shape_cast %34 : vector<1x8x8xf32> to vector<8x8xf32>
    %36 = vector.shape_cast %35 : vector<8x8xf32> to vector<1x8x8xf32>
    %37 = vector.broadcast %36 : vector<1x8x8xf32> to vector<4x8x8xf32>
    %38 = arith.mulf %37, %33 : vector<4x8x8xf32>
    %cst_9 = arith.constant 1.000000e+00 : f32
    %39 = vector.broadcast %cst_9 : f32 to vector<8x8xf32>
    %40 = arith.subf %39, %35 : vector<8x8xf32>
    %cst_10 = arith.constant 1.000000e+04 : f32
    %41 = vector.broadcast %cst_10 : f32 to vector<8x8xf32>
    %42 = arith.mulf %40, %41 : vector<8x8xf32>
    %43 = vector.shape_cast %42 : vector<8x8xf32> to vector<1x8x8xf32>
    %44 = vector.broadcast %43 : vector<1x8x8xf32> to vector<4x8x8xf32>
    %45 = arith.subf %38, %44 : vector<4x8x8xf32>
    %cst_11 = arith.constant 3.125000e-02 : f32
    %46 = vector.broadcast %cst_11 : f32 to vector<4x8x8xf32>
    %47 = arith.mulf %45, %46 : vector<4x8x8xf32>
    %cst_12 = arith.constant dense<0xFF800000> : vector<4x8xf32>
    %48 = vector.multi_reduction <maximumf>, %47, %cst_12 [2] : vector<4x8x8xf32> to vector<4x8xf32>
    %49 = vector.shape_cast %48 : vector<4x8xf32> to vector<4x8x1xf32>
    %cst_13 = arith.constant dense<0xFF800000> : vector<4x1xf32>
    %50 = vector.multi_reduction <maximumf>, %49, %cst_13 [1] : vector<4x8x1xf32> to vector<4x1xf32>
    %51 = vector.shape_cast %50 : vector<4x1xf32> to vector<4x1x1xf32>
    %52 = vector.broadcast %51 : vector<4x1x1xf32> to vector<4x8x8xf32>
    %53 = arith.subf %47, %52 : vector<4x8x8xf32>
    %cst_14 = arith.constant 3.200000e+01 : f32
    %54 = vector.broadcast %cst_14 : f32 to vector<4x8x8xf32>
    %55 = arith.mulf %53, %54 : vector<4x8x8xf32>
    %cst_15 = arith.constant dense<0xFF800000> : vector<4x8xf32>
    %56 = vector.multi_reduction <maximumf>, %55, %cst_15 [2] : vector<4x8x8xf32> to vector<4x8xf32>
    %57 = vector.shape_cast %56 : vector<4x8xf32> to vector<4x8x1xf32>
    %58 = vector.broadcast %57 : vector<4x8x1xf32> to vector<4x8x8xf32>
    %59 = arith.subf %55, %58 : vector<4x8x8xf32>
    %60 = math.exp %59 : vector<4x8x8xf32>
    %cst_16 = arith.constant dense<0.000000e+00> : vector<4x8xf32>
    %61 = vector.multi_reduction <add>, %60, %cst_16 [2] : vector<4x8x8xf32> to vector<4x8xf32>
    %62 = vector.shape_cast %61 : vector<4x8xf32> to vector<4x8x1xf32>
    %63 = vector.broadcast %62 : vector<4x8x1xf32> to vector<4x8x8xf32>
    %64 = arith.divf %60, %63 : vector<4x8x8xf32>
    "tpu.trace_start"() <{level = 10 : i32, message = "hqk,hkd->hqd"}> : () -> ()
    %cst_17 = arith.constant dense<0.000000e+00> : vector<4x8x8xf32>
    %65 = tpu.matmul %64, %32, %cst_17 {dimension_numbers = #tpu.dot_dimension_numbers<[2], [1], [1], [2], [0, 0, 0, 1, 1, 2], [0], [0]>} : vector<4x8x8xf32>, vector<4x8x8xf32>, vector<4x8x8xf32> -> vector<4x8x8xf32>
    "tpu.trace_stop"() : () -> ()
    %66 = vector.extract_strided_slice %65 {offsets = [0, 0, 0], sizes = [1, 8, 8], strides = [1, 1, 1]} : vector<4x8x8xf32> to vector<1x8x8xf32>
    %67 = vector.shape_cast %66 : vector<1x8x8xf32> to vector<8x8xf32>
    %68 = vector.extract_strided_slice %65 {offsets = [1, 0, 0], sizes = [1, 8, 8], strides = [1, 1, 1]} : vector<4x8x8xf32> to vector<1x8x8xf32>
    %69 = vector.shape_cast %68 : vector<1x8x8xf32> to vector<8x8xf32>
    %70 = vector.extract_strided_slice %65 {offsets = [2, 0, 0], sizes = [1, 8, 8], strides = [1, 1, 1]} : vector<4x8x8xf32> to vector<1x8x8xf32>
    %71 = vector.shape_cast %70 : vector<1x8x8xf32> to vector<8x8xf32>
    %72 = vector.extract_strided_slice %65 {offsets = [3, 0, 0], sizes = [1, 8, 8], strides = [1, 1, 1]} : vector<4x8x8xf32> to vector<1x8x8xf32>
    %73 = vector.shape_cast %72 : vector<1x8x8xf32> to vector<8x8xf32>
    %74 = tpu.concatenate %67, %69, %71, %73 in 1 : vector<8x8xf32>, vector<8x8xf32>, vector<8x8xf32>, vector<8x8xf32> -> vector<8x32xf32>
    %c0_18 = arith.constant 0 : index
    %c0_19 = arith.constant 0 : index
    %75 = vector.load %arg4[%c0_18, %c0_19] : memref<32x32xf32, #tpu.memory_space<vmem>>, vector<32x32xf32>
    %cst_20 = arith.constant dense<0.000000e+00> : vector<8x32xf32>
    %76 = tpu.matmul %74, %75, %cst_20 {dimension_numbers = #tpu.dot_dimension_numbers<[1], [0], [0], [1], [0, 0, 1, 1], [], []>} : vector<8x32xf32>, vector<32x32xf32>, vector<8x32xf32> -> vector<8x32xf32>
    %c0_21 = arith.constant 0 : index
    %c0_22 = arith.constant 0 : index
    %77 = vector.load %arg5[%c0_21, %c0_22] : memref<1x32xf32, #tpu.memory_space<vmem>>, vector<1x32xf32>
    %78 = vector.broadcast %77 : vector<1x32xf32> to vector<8x32xf32>
    %79 = arith.addf %76, %78 : vector<8x32xf32>
    %80 = vector.extract_strided_slice %79 {offsets = [0, 0], sizes = [2, 32], strides = [1, 1]} : vector<8x32xf32> to vector<2x32xf32>
    %81 = vector.extract_strided_slice %79 {offsets = [2, 0], sizes = [2, 32], strides = [1, 1]} : vector<8x32xf32> to vector<2x32xf32>
    %82 = vector.extract_strided_slice %79 {offsets = [4, 0], sizes = [2, 32], strides = [1, 1]} : vector<8x32xf32> to vector<2x32xf32>
    %83 = vector.extract_strided_slice %79 {offsets = [6, 0], sizes = [2, 32], strides = [1, 1]} : vector<8x32xf32> to vector<2x32xf32>
    %84 = tpu.concatenate %80, %81, %82, %83 in 1 : vector<2x32xf32>, vector<2x32xf32>, vector<2x32xf32>, vector<2x32xf32> -> vector<2x128xf32>
    %c0_23 = arith.constant 0 : index
    %c0_24 = arith.constant 0 : index
    %c0_25 = arith.constant 0 : index
    %85 = vector.load %arg7[%c0_23, %c0_24, %c0_25] : memref<1x2x128xf32, #tpu.memory_space<vmem>>, vector<1x2x128xf32>
    %86 = vector.shape_cast %85 : vector<1x2x128xf32> to vector<2x128xf32>
    %87 = vector.shape_cast %84 : vector<2x128xf32> to vector<1x2x128xf32>
    tpu.vector_store %arg7[%c0_23, %c0_24, %c0_25], %87 {strides = array<i32>} : memref<1x2x128xf32, #tpu.memory_space<vmem>>, vector<1x2x128xf32>,
    return
  }
  func.func @transform_0(%arg0: i32) -> (i32, i32) {
    %c0_i32 = arith.constant 0 : i32
    %c0_i32_0 = arith.constant 0 : i32
    return %arg0, %c0_i32 : i32, i32
  }
  func.func @transform_1(%arg0: i32) -> (i32, i32) {
    %c0_i32 = arith.constant 0 : i32
    %c0_i32_0 = arith.constant 0 : i32
    %c0_i32_1 = arith.constant 0 : i32
    return %c0_i32, %c0_i32_0 : i32, i32
  }
  func.func @transform_2(%arg0: i32) -> (i32, i32) {
    %c0_i32 = arith.constant 0 : i32
    %c0_i32_0 = arith.constant 0 : i32
    %c0_i32_1 = arith.constant 0 : i32
    return %c0_i32, %c0_i32_0 : i32, i32
  }
  func.func @transform_3(%arg0: i32) -> (i32, i32) {
    %c0_i32 = arith.constant 0 : i32
    %c0_i32_0 = arith.constant 0 : i32
    %c0_i32_1 = arith.constant 0 : i32
    return %c0_i32, %c0_i32_0 : i32, i32
  }
  func.func @transform_4(%arg0: i32) -> (i32, i32) {
    %c0_i32 = arith.constant 0 : i32
    %c0_i32_0 = arith.constant 0 : i32
    %c0_i32_1 = arith.constant 0 : i32
    return %c0_i32, %c0_i32_0 : i32, i32
  }
  func.func @transform_5(%arg0: i32) -> (i32, i32, i32) {
    %c0_i32 = arith.constant 0 : i32
    %c0_i32_0 = arith.constant 0 : i32
    %c0_i32_1 = arith.constant 0 : i32
    return %arg0, %c0_i32, %c0_i32_0 : i32, i32, i32
  }
  func.func @transform_6(%arg0: i32) -> (i32, i32, i32) {
    %c0_i32 = arith.constant 0 : i32
    %c0_i32_0 = arith.constant 0 : i32
    %c0_i32_1 = arith.constant 0 : i32
    return %arg0, %c0_i32, %c0_i32_0 : i32, i32, i32
  }
}

</mosaic_0001>

<llo_original>
// kernel: tpu_custom_call.1
$region0: #{tpu_custom_call.1}
  #allocation0 [shape = 'u32[]', space=smem, size = 0x4, offset = 0x4, fixed_abs, tag = 'smem constant byte address 0x4 - core index']
  #allocation1 [shape = 'u32[144,128]{1,0:T(1,128)}', space=vmem, size = 0x12000, scoped, tag = 'internal scratch']
  %s0 = inlined_call_operand.hbm [shape: f32[16,32], index: 0, kind: input, shape index: {}]
  %s1 = inlined_call_operand.hbm [shape: f32[32,96], index: 1, kind: input, shape index: {}]
  %s2 = inlined_call_operand.vmem [shape: f32[1,96], index: 2, kind: input, shape index: {}]
  %s3 = inlined_call_operand.hbm [shape: f32[32,32], index: 3, kind: input, shape index: {}]
  %s4 = inlined_call_operand.vmem [shape: f32[1,32], index: 4, kind: input, shape index: {}]
  %s5 = inlined_call_operand.vmem [shape: f32[2,8,8], index: 5, kind: input, shape index: {}]
  %s6 = inlined_call_operand.hbm [shape: f32[2,2,128], index: 6, kind: output, shape index: {}]
  %s7 = sld [smem:[#allocation0]]
  $region69: #{tpu_custom_call.1} parent=0
    _
  %s9 = ssub.s32 1, %s7
  %s10 = scalar_select 0, %s9, %s7
  $region1: #{tpu_custom_call.1} parent=0
    #allocation2 [shape = 'u8[8192]{0}', space=vmem, size = 0x2000, scoped, tag = 'input window, operand 0']
    #allocation3 [shape = 's32[2]{0}', space=sflag, size = 0x8, scoped, tag = 'scoped memory for tpu_custom_call.1']
    #allocation4 [shape = 's32[2]{0}', space=sflag, size = 0x8, scoped, tag = 'scoped memory for tpu_custom_call.1']
    #allocation5 [shape = 'u8[16384]{0}', space=vmem, size = 0x4000, scoped, tag = 'input window, operand 1, single buffered']
    #allocation6 [shape = 's32[1]{0}', space=sflag, size = 0x4, scoped, tag = 'scoped memory for tpu_custom_call.1']
    #allocation7 [shape = 'u8[16384]{0}', space=vmem, size = 0x4000, scoped, tag = 'input window, operand 3, single buffered']
    #allocation8 [shape = 'u8[2048]{0}', space=vmem, size = 0x800, scoped, tag = 'output window, operand 0']
    %11 = vsyncpa [#allocation3], 0
    %s12 = scalar_lea.sflag [#allocation3], 1
    %13 = vsyncpa %s12, 0
    %14 = vsyncpa [#allocation6], 0
    %15 = vsyncpa [#allocation4], 0
    %s16 = scalar_lea.sflag [#allocation4], 1
    %17 = vsyncpa %s16, 0
    loop: start=0, step=1, limit=4
    $region2: #{tpu_custom_call.1} parent=1 // loop_pre_header
      _
    $region3: #{tpu_custom_call.1} parent=1 // loop_header
      %s19 = sphi 0, %s23
      %p20 = scmp.ge.s32.totalorder %s19, 4
      %s29 = sphi 0, %s31
      %s32 = sphi 0, %s29
      %s33 = sphi 0, %s32
      %s49 = sphi 0, %s33
      %s53 = sphi 0, %s53
      %s55 = sphi 0, %s53
      %s56 = sphi 0, %s55
      %s70 = sphi 0, %s56
      %s74 = sphi 0, %s74
      %s76 = sphi 0, %s74
      %s77 = sphi 0, %s76
      %s91 = sphi 0, %s77
      %s95 = sphi 0, %s95
      %s97 = sphi 0, %s95
      %s98 = sphi 0, %s97
      %s112 = sphi 0, %s98
      %s116 = sphi 0, %s116
      %s118 = sphi 0, %s116
      %s119 = sphi 0, %s118
      %s133 = sphi 0, %s119
      %s139 = sphi 0, %s141
      %s142 = sphi 0, %s139
      %s143 = sphi 0, %s142
      %s159 = sphi 0, %s143
      %s165 = sphi 0, %s167
      %s168 = sphi 0, %s165
      %s169 = sphi 0, %s168
      %s185 = sphi 0, %s169
    $region4: #{tpu_custom_call.1} parent=1 // loop_header_branch
      %22 = sbr.rel (%p20) target = $region8
    $region5: #{tpu_custom_call.1} parent=1 // loop_body
      %s24 = ssub.s32 %s19, 1
      %s25 = ssub.s32 %s19, 2
      %s26 = sadd.s32 %s19, 1
      %s27 = ssub.s32 %s19, %s26
      %p28 = scmp.eq.s32.totalorder %s27, 0
      %s30 = sadd.s32 %s29, 1
      %s31 = scalar_select %p28, %s29, %s30
      %p34 = pneg %p28
      %p35 = scmp.eq.s32.totalorder %s19, 1
      %p36 = por %p34, %p35
      %p37 = scmp.ne.s32.totalorder %s29, %s32
      %p38 = scmp.eq.s32.totalorder %s19, 0
      %p39 = por %p37, %p38
      %p40 = scmp.ne.s32.totalorder %s29, %s32
      %p41 = scmp.eq.s32.totalorder %s24, 1
      %p42 = por %p40, %p41
      %p43 = scmp.ne.s32.totalorder %s32, %s33
      %p44 = scmp.eq.s32.totalorder %s24, 0
      %p45 = por %p43, %p44
      %p46 = scmp.ne.s32.totalorder %s32, %s33
      %p47 = scmp.eq.s32.totalorder %s25, 1
      %p48 = por %p46, %p47
      %p50 = scmp.ne.s32.totalorder %s33, %s49
      %p51 = scmp.eq.s32.totalorder %s25, 0
      %p52 = por %p50, %p51
      %s54 = sadd.s32 %s53, 1
      %p57 = scmp.eq.s32.totalorder %s19, 1
      %p58 = scmp.ne.s32.totalorder %s53, %s55
      %p59 = scmp.eq.s32.totalorder %s19, 0
      %p60 = por %p58, %p59
      %p61 = scmp.ne.s32.totalorder %s53, %s55
      %p62 = scmp.eq.s32.totalorder %s24, 1
      %p63 = por %p61, %p62
      %p64 = scmp.ne.s32.totalorder %s55, %s56
      %p65 = scmp.eq.s32.totalorder %s24, 0
      %p66 = por %p64, %p65
      %p67 = scmp.ne.s32.totalorder %s55, %s56
      %p68 = scmp.eq.s32.totalorder %s25, 1
      %p69 = por %p67, %p68
      %p71 = scmp.ne.s32.totalorder %s56, %s70
      %p72 = scmp.eq.s32.totalorder %s25, 0
      %p73 = por %p71, %p72
      %s75 = sadd.s32 %s74, 1
      %p78 = scmp.eq.s32.totalorder %s19, 1
      %p79 = scmp.ne.s32.totalorder %s74, %s76
      %p80 = scmp.eq.s32.totalorder %s19, 0
      %p81 = por %p79, %p80
      %p82 = scmp.ne.s32.totalorder %s74, %s76
      %p83 = scmp.eq.s32.totalorder %s24, 1
      %p84 = por %p82, %p83
      %p85 = scmp.ne.s32.totalorder %s76, %s77
      %p86 = scmp.eq.s32.totalorder %s24, 0
      %p87 = por %p85, %p86
      %p88 = scmp.ne.s32.totalorder %s76, %s77
      %p89 = scmp.eq.s32.totalorder %s25, 1
      %p90 = por %p88, %p89
      %p92 = scmp.ne.s32.totalorder %s77, %s91
      %p93 = scmp.eq.s32.totalorder %s25, 0
      %p94 = por %p92, %p93
      %s96 = sadd.s32 %s95, 1
      %p99 = scmp.eq.s32.totalorder %s19, 1
      %p100 = scmp.ne.s32.totalorder %s95, %s97
      %p101 = scmp.eq.s32.totalorder %s19, 0
      %p102 = por %p100, %p101
      %p103 = scmp.ne.s32.totalorder %s95, %s97
      %p104 = scmp.eq.s32.totalorder %s24, 1
      %p105 = por %p103, %p104
      %p106 = scmp.ne.s32.totalorder %s97, %s98
      %p107 = scmp.eq.s32.totalorder %s24, 0
      %p108 = por %p106, %p107
      %p109 = scmp.ne.s32.totalorder %s97, %s98
      %p110 = scmp.eq.s32.totalorder %s25, 1
      %p111 = por %p109, %p110
      %p113 = scmp.ne.s32.totalorder %s98, %s112
      %p114 = scmp.eq.s32.totalorder %s25, 0
      %p115 = por %p113, %p114
      %s117 = sadd.s32 %s116, 1
      %p120 = scmp.eq.s32.totalorder %s19, 1
      %p121 = scmp.ne.s32.totalorder %s116, %s118
      %p122 = scmp.eq.s32.totalorder %s19, 0
      %p123 = por %p121, %p122
      %p124 = scmp.ne.s32.totalorder %s116, %s118
      %p125 = scmp.eq.s32.totalorder %s24, 1
      %p126 = por %p124, %p125
      %p127 = scmp.ne.s32.totalorder %s118, %s119
      %p128 = scmp.eq.s32.totalorder %s24, 0
      %p129 = por %p127, %p128
      %p130 = scmp.ne.s32.totalorder %s118, %s119
      %p131 = scmp.eq.s32.totalorder %s25, 1
      %p132 = por %p130, %p131
      %p134 = scmp.ne.s32.totalorder %s119, %s133
      %p135 = scmp.eq.s32.totalorder %s25, 0
      %p136 = por %p134, %p135
      %s137 = ssub.s32 %s19, %s26
      %p138 = scmp.eq.s32.totalorder %s137, 0
      %s140 = sadd.s32 %s139, 1
      %s141 = scalar_select %p138, %s139, %s140
      %p144 = pneg %p138
      %p145 = scmp.eq.s32.totalorder %s19, 1
      %p146 = por %p144, %p145
      %p147 = scmp.ne.s32.totalorder %s139, %s142
      %p148 = scmp.eq.s32.totalorder %s19, 0
      %p149 = por %p147, %p148
      %p150 = scmp.ne.s32.totalorder %s139, %s142
      %p151 = scmp.eq.s32.totalorder %s24, 1
      %p152 = por %p150, %p151
      %p153 = scmp.ne.s32.totalorder %s142, %s143
      %p154 = scmp.eq.s32.totalorder %s24, 0
      %p155 = por %p153, %p154
      %p156 = scmp.ne.s32.totalorder %s142, %s143
      %p157 = scmp.eq.s32.totalorder %s25, 1
      %p158 = por %p156, %p157
      %p160 = scmp.ne.s32.totalorder %s143, %s159
      %p161 = scmp.eq.s32.totalorder %s25, 0
      %p162 = por %p160, %p161
      %s163 = ssub.s32 %s19, %s26
      %p164 = scmp.eq.s32.totalorder %s163, 0
      %s166 = sadd.s32 %s165, 1
      %s167 = scalar_select %p164, %s165, %s166
      %p170 = pneg %p164
      %p171 = scmp.eq.s32.totalorder %s19, 1
      %p172 = por %p170, %p171
      %p173 = scmp.ne.s32.totalorder %s165, %s168
      %p174 = scmp.eq.s32.totalorder %s19, 0
      %p175 = por %p173, %p174
      %p176 = scmp.ne.s32.totalorder %s165, %s168
      %p177 = scmp.eq.s32.totalorder %s24, 1
      %p178 = por %p176, %p177
      %p179 = scmp.ne.s32.totalorder %s168, %s169
      %p180 = scmp.eq.s32.totalorder %s24, 0
      %p181 = por %p179, %p180
      %p182 = scmp.ne.s32.totalorder %s168, %s169
      %p183 = scmp.eq.s32.totalorder %s25, 1
      %p184 = por %p182, %p183
      %p186 = scmp.ne.s32.totalorder %s169, %s185
      %p187 = scmp.eq.s32.totalorder %s25, 0
      %p188 = por %p186, %p187
      %p189 = scmp.le.s32.totalorder 1, %s19
      %p190 = scmp.lt.s32.totalorder %s19, 3
      %p191 = pnand %p189, %p190
      %p192 = pneg %p191
      // Predicated region
      $region9: #{tpu_custom_call.1} parent=5 // pred_check
        _
      $region10: #{tpu_custom_call.1} parent=5 // pred_check_branch
        %194 = sbr.rel (%p191) target = $region12
      $region11: #{tpu_custom_call.1} parent=5 // pred_region
        %s195 = ssub.s32 %s19, 1
        // Predicated region
        $region13: #{tpu_custom_call.1} parent=11 // pred_check
          %p196 = pneg %p66
        $region14: #{tpu_custom_call.1} parent=11 // pred_check_branch
          %198 = sbr.rel (%p196) target = $region16
        $region15: #{tpu_custom_call.1} parent=11 // pred_region
          %s200 = ssub.s32 512, 512
          %201 = vsyncadd [#allocation6], %s200
          %s202 = sshll.u32 [#allocation5], 4
          %s203 = int_to_ptr.vmem [resolvable:$true] %s202
          %208 = dma.hbm_to_vmem [thread:$0]  %s1, 512, %s203, [#allocation6], 128, 128, 8
        $region16: #{tpu_custom_call.1} parent=11 // pred_fallthru
          _
        // Predicated region
        $region17: #{tpu_custom_call.1} parent=11 // pred_check
          %p209 = pneg %p87
        $region18: #{tpu_custom_call.1} parent=11 // pred_check_branch
          %211 = sbr.rel (%p209) target = $region20
        $region19: #{tpu_custom_call.1} parent=11 // pred_region
          _
        $region20: #{tpu_custom_call.1} parent=11 // pred_fallthru
          _
        // Predicated region
        $region21: #{tpu_custom_call.1} parent=11 // pred_check
          %p212 = pneg %p108
        $region22: #{tpu_custom_call.1} parent=11 // pred_check_branch
          %214 = sbr.rel (%p212) target = $region24
        $region23: #{tpu_custom_call.1} parent=11 // pred_region
          %s216 = ssub.s32 512, 512
          %217 = vsyncadd [#allocation6], %s216
          %s218 = sshll.u32 [#allocation7], 4
          %s219 = int_to_ptr.vmem [resolvable:$true] %s218
          %224 = dma.hbm_to_vmem [thread:$0]  %s3, 512, %s219, [#allocation6], 128, 128, 8
        $region24: #{tpu_custom_call.1} parent=11 // pred_fallthru
          _
        // Predicated region
        $region25: #{tpu_custom_call.1} parent=11 // pred_check
          %p225 = pneg %p129
        $region26: #{tpu_custom_call.1} parent=11 // pred_check_branch
          %227 = sbr.rel (%p225) target = $region28
        $region27: #{tpu_custom_call.1} parent=11 // pred_region
          _
        $region28: #{tpu_custom_call.1} parent=11 // pred_fallthru
          _
      $region12: #{tpu_custom_call.1} parent=5 // pred_fallthru
        _
      %p228 = scmp.lt.s32.totalorder %s19, 2
      // Predicated region
      $region29: #{tpu_custom_call.1} parent=5 // pred_check
        %p229 = pneg %p228
      $region30: #{tpu_custom_call.1} parent=5 // pred_check_branch
        %231 = sbr.rel (%p229) target = $region32
      $region31: #{tpu_custom_call.1} parent=5 // pred_region
        // Predicated region
        $region33: #{tpu_custom_call.1} parent=31 // pred_check
          %p232 = pneg %p39
        $region34: #{tpu_custom_call.1} parent=31 // pred_check_branch
          %234 = sbr.rel (%p232) target = $region36
        $region35: #{tpu_custom_call.1} parent=31 // pred_region
          %s235 = sand.u32 %s29, 1
          %s236 = scalar_lea.sflag [#allocation3], %s235
          %s237 = sand.u32 %s29, 1
          %s238 = smul.addr %s237, 8
          %s239 = scalar_lea.vmem [#allocation2], %s238
          %s241 = ssub.s32 128, 128
          %242 = vsyncadd %s236, %s241
          %s243 = smul.addr %s19, 128
          %s244 = scalar_lea.hbm %s0, %s243
          %s246 = sshll.u32 %s239, 4
          %s247 = int_to_ptr.vmem [resolvable:$true] %s246
          %249 = dma.hbm_to_vmem [thread:$0]  %s244, 128, %s247, %s236
        $region36: #{tpu_custom_call.1} parent=31 // pred_fallthru
          _
        // Predicated region
        $region37: #{tpu_custom_call.1} parent=31 // pred_check
          %p250 = pneg %p149
        $region38: #{tpu_custom_call.1} parent=31 // pred_check_branch
          %252 = sbr.rel (%p250) target = $region40
        $region39: #{tpu_custom_call.1} parent=31 // pred_region
          %p253 = scmp.lt.s32.totalorder %s19, 1
          %s254 = scalar_select %p253, %s19, 1
          %s255 = smul.addr %s254, 8
          %s256 = scalar_lea.vmem %s5, %s255
        $region40: #{tpu_custom_call.1} parent=31 // pred_fallthru
          _
      $region32: #{tpu_custom_call.1} parent=5 // pred_fallthru
        _
      %p257 = scmp.le.s32.totalorder 1, %s19
      %p258 = scmp.lt.s32.totalorder %s19, 3
      %p259 = pnand %p257, %p258
      %p260 = pneg %p259
      // Predicated region
      $region41: #{tpu_custom_call.1} parent=5 // pred_check
        _
      $region42: #{tpu_custom_call.1} parent=5 // pred_check_branch
        %262 = sbr.rel (%p259) target = $region44
      $region43: #{tpu_custom_call.1} parent=5 // pred_region
        %s263 = ssub.s32 %s19, 1
        %s264 = sand.u32 %s32, 1
        %s265 = scalar_lea.sflag [#allocation3], %s264
        %s266 = sand.u32 %s32, 1
        %s267 = smul.addr %s266, 8
        %s268 = scalar_lea.vmem [#allocation2], %s267
        // Predicated region
        $region45: #{tpu_custom_call.1} parent=43 // pred_check
          %p269 = pneg %p45
        $region46: #{tpu_custom_call.1} parent=43 // pred_check_branch
          %271 = sbr.rel (%p269) target = $region48
        $region47: #{tpu_custom_call.1} parent=43 // pred_region
          %272 = dma.done %s265, 128
        $region48: #{tpu_custom_call.1} parent=43 // pred_fallthru
          _
        // Predicated region
        $region49: #{tpu_custom_call.1} parent=43 // pred_check
          %p273 = pneg %p66
        $region50: #{tpu_custom_call.1} parent=43 // pred_check_branch
          %275 = sbr.rel (%p273) target = $region52
        $region51: #{tpu_custom_call.1} parent=43 // pred_region
          %276 = dma.done [#allocation6], 512
        $region52: #{tpu_custom_call.1} parent=43 // pred_fallthru
          _
        // Predicated region
        $region53: #{tpu_custom_call.1} parent=43 // pred_check
          %p277 = pneg %p108
        $region54: #{tpu_custom_call.1} parent=43 // pred_check_branch
          %279 = sbr.rel (%p277) target = $region56
        $region55: #{tpu_custom_call.1} parent=43 // pred_region
          %280 = dma.done [#allocation6], 512
        $region56: #{tpu_custom_call.1} parent=43 // pred_fallthru
          _
        %s281 = sand.u32 %s32, 1
        %s282 = scalar_lea.sflag [#allocation3], %s281
        %s283 = sand.u32 %s32, 1
        %s284 = smul.addr %s283, 8
        %s285 = scalar_lea.vmem [#allocation2], %s284
        %p286 = pneg %p45
        %p287 = pneg %p42
        %p288 = pneg %p66
        %p289 = pneg %p63
        %p290 = pneg %p87
        %p291 = pneg %p84
        %p292 = pneg %p108
        %p293 = pneg %p105
        %p294 = pneg %p129
        %p295 = pneg %p126
        %p296 = scmp.lt.s32.totalorder %s24, 1
        %s297 = scalar_select %p296, %s24, 1
        %s298 = smul.addr %s297, 8
        %s299 = scalar_lea.vmem %s5, %s298
        %p300 = pneg %p155
        %p301 = pneg %p152
        %p302 = pneg %p181
        %p303 = pneg %p178
        %s304 = sand.u32 %s168, 1
        %s305 = scalar_lea.sflag [#allocation4], %s304
        %s306 = sand.u32 %s168, 1
        %s307 = smul.addr %s306, 2
        %s308 = scalar_lea.vmem [#allocation8], %s307
        %p309 = scmp.lt.s32.totalorder %s24, 1
        %s310 = scalar_select %p309, %s24, 1
        %s311 = smul.addr %s310, 8
        %s312 = scalar_lea.vmem %s5, %s311
        %v313 = vld [vmem:[%s268] sm:$0xff]
        %v314 = vld [vmem:[#allocation5] sm:$0xff]
        %v315 = vld [vmem:[#allocation5 + $0x8] sm:$0xff]
        %v316 = vld [vmem:[#allocation5 + $0x10] sm:$0xff]
        %v317 = vld [vmem:[#allocation5 + $0x18] sm:$0xff]
        %v318 = vld [vmem:[%s2] sm:$0x1]
        %v320 = vlaneseq
        %v321 = vshrl.u32 %v320, 7
        %v322 = vsub.s32 0, %v321
        %v323 = vrot.slane %v318, %v322
        %vm325 = vcmask 261120
        %v327 = vsel %vm325, %v313, 0
        %329 = vmatprep.subr.mxu0 0.0
        %330 = vmatpush1.msra.mxu0 %v314
        %331 = vmatprep.subr.mxu0 0.0
        %332 = vmatpush1.msra.mxu0 %v315
        %333 = vmatprep.subr.mxu0 0.0
        %334 = vmatpush1.msra.mxu0 %v316
        %335 = vmatprep.subr.mxu0 0.0
        %336 = vmatpush1.msra.mxu0 %v317
        %337 = vmatprep.subr.mxu0 0.0
        %338 = vmatpush1.msra.mxu0 0.0
        %339 = vmatprep.subr.mxu0 0.0
        %340 = vmatpush1.msra.mxu0 0.0
        %341 = vmatprep.subr.mxu0 0.0
        %342 = vmatpush1.msra.mxu0 0.0
        %343 = vmatprep.subr.mxu0 0.0
        %344 = vmatpush1.msra.mxu0 0.0
        %345 = vmatprep.subr.mxu0 0.0
        %346 = vmatpush1.msra.mxu0 0.0
        %347 = vmatprep.subr.mxu0 0.0
        %348 = vmatpush1.msra.mxu0 0.0
        %349 = vmatprep.subr.mxu0 0.0
        %350 = vmatpush1.msra.mxu0 0.0
        %351 = vmatprep.subr.mxu0 0.0
        %352 = vmatpush1.msra.mxu0 0.0
        %353 = vmatprep.subr.mxu0 0.0
        %354 = vmatpush1.msra.mxu0 0.0
        %355 = vmatprep.subr.mxu0 0.0
        %356 = vmatpush1.msra.mxu0 0.0
        %357 = vmatprep.subr.mxu0 0.0
        %358 = vmatpush1.msra.mxu0 0.0
        %359 = vmatprep.subr.mxu0 0.0
        %360 = vmatpush1.msra.mxu0 0.0
        %361 = vmatprep.subr.mxu0 0.0
        %362 = vmatpush1.msra.mxu0 0.0
        %363 = vmatprep.subr.mxu0 0.0
        %364 = vmatpush1.msra.mxu0 0.0
        %365 = vmatprep.subr.mxu0 0.0
        %366 = vmatpush1.msra.mxu0 0.0
        %367 = vmatprep.subr.mxu0 0.0
        %368 = vmatpush1.msra.mxu0 0.0
        %369 = vmatprep.subr.mxu0 0.0
        %370 = vmatpush1.msra.mxu0 0.0
        %371 = vmatprep.subr.mxu0 0.0
        %372 = vmatpush1.msra.mxu0 0.0
        %373 = vmatprep.subr.mxu0 0.0
        %374 = vmatpush1.msra.mxu0 0.0
        %375 = vmatprep.subr.mxu0 0.0
        %376 = vmatpush1.msra.mxu0 0.0
        %377 = vmatprep.subr.mxu0 0.0
        %378 = vmatpush1.msra.mxu0 0.0
        %379 = vmatprep.subr.mxu0 0.0
        %380 = vmatpush1.msra.mxu0 0.0
        %381 = vmatprep.subr.mxu0 0.0
        %382 = vmatpush1.msra.mxu0 0.0
        %383 = vmatprep.subr.mxu0 0.0
        %384 = vmatpush1.msra.mxu0 0.0
        %385 = vmatprep.subr.mxu0 0.0
        %386 = vmatpush1.msra.mxu0 0.0
        %387 = vmatprep.subr.mxu0 0.0
        %388 = vmatpush1.msra.mxu0 0.0
        %389 = vmatprep.subr.mxu0 0.0
        %390 = vmatpush1.msra.mxu0 0.0
        %391 = vmatprep.subr.mxu0 0.0
        %392 = vmatpush1.msra.mxu0 0.0
        %393 = vmatprep.mubr.f32.mxu0 0.0
        %394 = vmatmul.mubr.f32.gmra.mrb[0].mxu0 %v327
        %v395 = vpop.f32.mrb[0].mxu0
        %v396 = vadd.f32 %v323, %v395
        %v397 = vpop.f32.mrb[0].mxu0
        %398 = vdwg.mxu0
        %400 = vrot.lane.b32.xlu0 %v396, 120
        %v401 = vpop.permute.xlu0 %400
        %402 = vrot.lane.b32.xlu0 %v396, 112
        %v403 = vpop.permute.xlu0 %402
        %404 = vrot.lane.b32.xlu0 %v396, 104
        %v405 = vpop.permute.xlu0 %404
        %406 = vrot.lane.b32.xlu0 %v396, 96
        %v407 = vpop.permute.xlu0 %406
        %vm408 = vcmask 64512
        %v409 = vsel %vm408, %v396, 0
        %v411 = vsel %vm408, %v407, 0
        %413 = vmatprep.subr.mxu0 0.0
        %414 = vmatpush1.xpose.msra.mxu0 %v411
        %415 = vmatprep.subr.mxu0 0.0
        %416 = vmatpush1.xpose.msra.mxu0 0.0
        %417 = vmatprep.subr.mxu0 0.0
        %418 = vmatpush1.xpose.msra.mxu0 0.0
        %419 = vmatprep.subr.mxu0 0.0
        %420 = vmatpush1.xpose.msra.mxu0 0.0
        %421 = vmatprep.subr.mxu0 0.0
        %422 = vmatpush1.xpose.msra.mxu0 0.0
        %423 = vmatprep.subr.mxu0 0.0
        %424 = vmatpush1.xpose.msra.mxu0 0.0
        %425 = vmatprep.subr.mxu0 0.0
        %426 = vmatpush1.xpose.msra.mxu0 0.0
        %427 = vmatprep.subr.mxu0 0.0
        %428 = vmatpush1.xpose.msra.mxu0 0.0
        %429 = vmatprep.subr.mxu0 0.0
        %430 = vmatpush1.xpose.msra.mxu0 0.0
        %431 = vmatprep.subr.mxu0 0.0
        %432 = vmatpush1.xpose.msra.mxu0 0.0
        %433 = vmatprep.subr.mxu0 0.0
        %434 = vmatpush1.xpose.msra.mxu0 0.0
        %435 = vmatprep.subr.mxu0 0.0
        %436 = vmatpush1.xpose.msra.mxu0 0.0
        %437 = vmatprep.subr.mxu0 0.0
        %438 = vmatpush1.xpose.msra.mxu0 0.0
        %439 = vmatprep.subr.mxu0 0.0
        %440 = vmatpush1.xpose.msra.mxu0 0.0
        %441 = vmatprep.subr.mxu0 0.0
        %442 = vmatpush1.xpose.msra.mxu0 0.0
        %443 = vmatprep.subr.mxu0 0.0
        %444 = vmatpush1.xpose.msra.mxu0 0.0
        %445 = vmatprep.subr.mxu0 0.0
        %446 = vmatpush1.xpose.msra.mxu0 0.0
        %447 = vmatprep.subr.mxu0 0.0
        %448 = vmatpush1.xpose.msra.mxu0 0.0
        %449 = vmatprep.subr.mxu0 0.0
        %450 = vmatpush1.xpose.msra.mxu0 0.0
        %451 = vmatprep.subr.mxu0 0.0
        %452 = vmatpush1.xpose.msra.mxu0 0.0
        %453 = vmatprep.subr.mxu0 0.0
        %454 = vmatpush1.xpose.msra.mxu0 0.0
        %455 = vmatprep.subr.mxu0 0.0
        %456 = vmatpush1.xpose.msra.mxu0 0.0
        %457 = vmatprep.subr.mxu0 0.0
        %458 = vmatpush1.xpose.msra.mxu0 0.0
        %459 = vmatprep.subr.mxu0 0.0
        %460 = vmatpush1.xpose.msra.mxu0 0.0
        %461 = vmatprep.subr.mxu0 0.0
        %462 = vmatpush1.xpose.msra.mxu0 0.0
        %463 = vmatprep.subr.mxu0 0.0
        %464 = vmatpush1.xpose.msra.mxu0 0.0
        %465 = vmatprep.subr.mxu0 0.0
        %466 = vmatpush1.xpose.msra.mxu0 0.0
        %467 = vmatprep.subr.mxu0 0.0
        %468 = vmatpush1.xpose.msra.mxu0 0.0
        %469 = vmatprep.subr.mxu0 0.0
        %470 = vmatpush1.xpose.msra.mxu0 0.0
        %471 = vmatprep.subr.mxu0 0.0
        %472 = vmatpush1.xpose.msra.mxu0 0.0
        %473 = vmatprep.subr.mxu0 0.0
        %474 = vmatpush1.xpose.msra.mxu0 0.0
        %475 = vmatprep.subr.mxu0 0.0
        %476 = vmatpush1.xpose.msra.mxu0 0.0
        %477 = vmatprep.mubr.f32.mxu0 0.0
        %478 = vmatmul.mubr.f32.gmra.mrb[0].mxu0 %v409
        %v479 = vpop.f32.mrb[0].mxu0
        %v480 = vadd.f32 0.0, %v479
        %v481 = vpop.f32.mrb[0].mxu0
        %482 = vdwg.mxu0
        %483 = vrot.lane.b32.xlu0 %v401, 96
        %v484 = vpop.permute.xlu0 %483
        %v485 = vsel %vm408, %v401, 0
        %v487 = vsel %vm408, %v484, 0
        %489 = vmatprep.subr.mxu0 0.0
        %490 = vmatpush1.xpose.msra.mxu0 %v487
        %491 = vmatprep.subr.mxu0 0.0
        %492 = vmatpush1.xpose.msra.mxu0 0.0
        %493 = vmatprep.subr.mxu0 0.0
        %494 = vmatpush1.xpose.msra.mxu0 0.0
        %495 = vmatprep.subr.mxu0 0.0
        %496 = vmatpush1.xpose.msra.mxu0 0.0
        %497 = vmatprep.subr.mxu0 0.0
        %498 = vmatpush1.xpose.msra.mxu0 0.0
        %499 = vmatprep.subr.mxu0 0.0
        %500 = vmatpush1.xpose.msra.mxu0 0.0
        %501 = vmatprep.subr.mxu0 0.0
        %502 = vmatpush1.xpose.msra.mxu0 0.0
        %503 = vmatprep.subr.mxu0 0.0
        %504 = vmatpush1.xpose.msra.mxu0 0.0
        %505 = vmatprep.subr.mxu0 0.0
        %506 = vmatpush1.xpose.msra.mxu0 0.0
        %507 = vmatprep.subr.mxu0 0.0
        %508 = vmatpush1.xpose.msra.mxu0 0.0
        %509 = vmatprep.subr.mxu0 0.0
        %510 = vmatpush1.xpose.msra.mxu0 0.0
        %511 = vmatprep.subr.mxu0 0.0
        %512 = vmatpush1.xpose.msra.mxu0 0.0
        %513 = vmatprep.subr.mxu0 0.0
        %514 = vmatpush1.xpose.msra.mxu0 0.0
        %515 = vmatprep.subr.mxu0 0.0
        %516 = vmatpush1.xpose.msra.mxu0 0.0
        %517 = vmatprep.subr.mxu0 0.0
        %518 = vmatpush1.xpose.msra.mxu0 0.0
        %519 = vmatprep.subr.mxu0 0.0
        %520 = vmatpush1.xpose.msra.mxu0 0.0
        %521 = vmatprep.subr.mxu0 0.0
        %522 = vmatpush1.xpose.msra.mxu0 0.0
        %523 = vmatprep.subr.mxu0 0.0
        %524 = vmatpush1.xpose.msra.mxu0 0.0
        %525 = vmatprep.subr.mxu0 0.0
        %526 = vmatpush1.xpose.msra.mxu0 0.0
        %527 = vmatprep.subr.mxu0 0.0
        %528 = vmatpush1.xpose.msra.mxu0 0.0
        %529 = vmatprep.subr.mxu0 0.0
        %530 = vmatpush1.xpose.msra.mxu0 0.0
        %531 = vmatprep.subr.mxu0 0.0
        %532 = vmatpush1.xpose.msra.mxu0 0.0
        %533 = vmatprep.subr.mxu0 0.0
        %534 = vmatpush1.xpose.msra.mxu0 0.0
        %535 = vmatprep.subr.mxu0 0.0
        %536 = vmatpush1.xpose.msra.mxu0 0.0
        %537 = vmatprep.subr.mxu0 0.0
        %538 = vmatpush1.xpose.msra.mxu0 0.0
        %539 = vmatprep.subr.mxu0 0.0
        %540 = vmatpush1.xpose.msra.mxu0 0.0
        %541 = vmatprep.subr.mxu0 0.0
        %542 = vmatpush1.xpose.msra.mxu0 0.0
        %543 = vmatprep.subr.mxu0 0.0
        %544 = vmatpush1.xpose.msra.mxu0 0.0
        %545 = vmatprep.subr.mxu0 0.0
        %546 = vmatpush1.xpose.msra.mxu0 0.0
        %547 = vmatprep.subr.mxu0 0.0
        %548 = vmatpush1.xpose.msra.mxu0 0.0
        %549 = vmatprep.subr.mxu0 0.0
        %550 = vmatpush1.xpose.msra.mxu0 0.0
        %551 = vmatprep.subr.mxu0 0.0
        %552 = vmatpush1.xpose.msra.mxu0 0.0
        %553 = vmatprep.mubr.f32.mxu0 0.0
        %554 = vmatmul.mubr.f32.gmra.mrb[0].mxu0 %v485
        %v555 = vpop.f32.mrb[0].mxu0
        %v556 = vadd.f32 0.0, %v555
        %v557 = vpop.f32.mrb[0].mxu0
        %558 = vdwg.mxu0
        %559 = vrot.lane.b32.xlu0 %v403, 96
        %v560 = vpop.permute.xlu0 %559
        %v561 = vsel %vm408, %v403, 0
        %v563 = vsel %vm408, %v560, 0
        %565 = vmatprep.subr.mxu0 0.0
        %566 = vmatpush1.xpose.msra.mxu0 %v563
        %567 = vmatprep.subr.mxu0 0.0
        %568 = vmatpush1.xpose.msra.mxu0 0.0
        %569 = vmatprep.subr.mxu0 0.0
        %570 = vmatpush1.xpose.msra.mxu0 0.0
        %571 = vmatprep.subr.mxu0 0.0
        %572 = vmatpush1.xpose.msra.mxu0 0.0
        %573 = vmatprep.subr.mxu0 0.0
        %574 = vmatpush1.xpose.msra.mxu0 0.0
        %575 = vmatprep.subr.mxu0 0.0
        %576 = vmatpush1.xpose.msra.mxu0 0.0
        %577 = vmatprep.subr.mxu0 0.0
        %578 = vmatpush1.xpose.msra.mxu0 0.0
        %579 = vmatprep.subr.mxu0 0.0
        %580 = vmatpush1.xpose.msra.mxu0 0.0
        %581 = vmatprep.subr.mxu0 0.0
        %582 = vmatpush1.xpose.msra.mxu0 0.0
        %583 = vmatprep.subr.mxu0 0.0
        %584 = vmatpush1.xpose.msra.mxu0 0.0
        %585 = vmatprep.subr.mxu0 0.0
        %586 = vmatpush1.xpose.msra.mxu0 0.0
        %587 = vmatprep.subr.mxu0 0.0
        %588 = vmatpush1.xpose.msra.mxu0 0.0
        %589 = vmatprep.subr.mxu0 0.0
        %590 = vmatpush1.xpose.msra.mxu0 0.0
        %591 = vmatprep.subr.mxu0 0.0
        %592 = vmatpush1.xpose.msra.mxu0 0.0
        %593 = vmatprep.subr.mxu0 0.0
        %594 = vmatpush1.xpose.msra.mxu0 0.0
        %595 = vmatprep.subr.mxu0 0.0
        %596 = vmatpush1.xpose.msra.mxu0 0.0
        %597 = vmatprep.subr.mxu0 0.0
        %598 = vmatpush1.xpose.msra.mxu0 0.0
        %599 = vmatprep.subr.mxu0 0.0
        %600 = vmatpush1.xpose.msra.mxu0 0.0
        %601 = vmatprep.subr.mxu0 0.0
        %602 = vmatpush1.xpose.msra.mxu0 0.0
        %603 = vmatprep.subr.mxu0 0.0
        %604 = vmatpush1.xpose.msra.mxu0 0.0
        %605 = vmatprep.subr.mxu0 0.0
        %606 = vmatpush1.xpose.msra.mxu0 0.0
        %607 = vmatprep.subr.mxu0 0.0
        %608 = vmatpush1.xpose.msra.mxu0 0.0
        %609 = vmatprep.subr.mxu0 0.0
        %610 = vmatpush1.xpose.msra.mxu0 0.0
        %611 = vmatprep.subr.mxu0 0.0
        %612 = vmatpush1.xpose.msra.mxu0 0.0
        %613 = vmatprep.subr.mxu0 0.0
        %614 = vmatpush1.xpose.msra.mxu0 0.0
        %615 = vmatprep.subr.mxu0 0.0
        %616 = vmatpush1.xpose.msra.mxu0 0.0
        %617 = vmatprep.subr.mxu0 0.0
        %618 = vmatpush1.xpose.msra.mxu0 0.0
        %619 = vmatprep.subr.mxu0 0.0
        %620 = vmatpush1.xpose.msra.mxu0 0.0
        %621 = vmatprep.subr.mxu0 0.0
        %622 = vmatpush1.xpose.msra.mxu0 0.0
        %623 = vmatprep.subr.mxu0 0.0
        %624 = vmatpush1.xpose.msra.mxu0 0.0
        %625 = vmatprep.subr.mxu0 0.0
        %626 = vmatpush1.xpose.msra.mxu0 0.0
        %627 = vmatprep.subr.mxu0 0.0
        %628 = vmatpush1.xpose.msra.mxu0 0.0
        %629 = vmatprep.mubr.f32.mxu0 0.0
        %630 = vmatmul.mubr.f32.gmra.mrb[0].mxu0 %v561
        %v631 = vpop.f32.mrb[0].mxu0
        %v632 = vadd.f32 0.0, %v631
        %v633 = vpop.f32.mrb[0].mxu0
        %634 = vdwg.mxu0
        %635 = vrot.lane.b32.xlu0 %v405, 96
        %v636 = vpop.permute.xlu0 %635
        %v637 = vsel %vm408, %v405, 0
        %v639 = vsel %vm408, %v636, 0
        %641 = vmatprep.subr.mxu0 0.0
        %642 = vmatpush1.xpose.msra.mxu0 %v639
        %643 = vmatprep.subr.mxu0 0.0
        %644 = vmatpush1.xpose.msra.mxu0 0.0
        %645 = vmatprep.subr.mxu0 0.0
        %646 = vmatpush1.xpose.msra.mxu0 0.0
        %647 = vmatprep.subr.mxu0 0.0
        %648 = vmatpush1.xpose.msra.mxu0 0.0
        %649 = vmatprep.subr.mxu0 0.0
        %650 = vmatpush1.xpose.msra.mxu0 0.0
        %651 = vmatprep.subr.mxu0 0.0
        %652 = vmatpush1.xpose.msra.mxu0 0.0
        %653 = vmatprep.subr.mxu0 0.0
        %654 = vmatpush1.xpose.msra.mxu0 0.0
        %655 = vmatprep.subr.mxu0 0.0
        %656 = vmatpush1.xpose.msra.mxu0 0.0
        %657 = vmatprep.subr.mxu0 0.0
        %658 = vmatpush1.xpose.msra.mxu0 0.0
        %659 = vmatprep.subr.mxu0 0.0
        %660 = vmatpush1.xpose.msra.mxu0 0.0
        %661 = vmatprep.subr.mxu0 0.0
        %662 = vmatpush1.xpose.msra.mxu0 0.0
        %663 = vmatprep.subr.mxu0 0.0
        %664 = vmatpush1.xpose.msra.mxu0 0.0
        %665 = vmatprep.subr.mxu0 0.0
        %666 = vmatpush1.xpose.msra.mxu0 0.0
        %667 = vmatprep.subr.mxu0 0.0
        %668 = vmatpush1.xpose.msra.mxu0 0.0
        %669 = vmatprep.subr.mxu0 0.0
        %670 = vmatpush1.xpose.msra.mxu0 0.0
        %671 = vmatprep.subr.mxu0 0.0
        %672 = vmatpush1.xpose.msra.mxu0 0.0
        %673 = vmatprep.subr.mxu0 0.0
        %674 = vmatpush1.xpose.msra.mxu0 0.0
        %675 = vmatprep.subr.mxu0 0.0
        %676 = vmatpush1.xpose.msra.mxu0 0.0
        %677 = vmatprep.subr.mxu0 0.0
        %678 = vmatpush1.xpose.msra.mxu0 0.0
        %679 = vmatprep.subr.mxu0 0.0
        %680 = vmatpush1.xpose.msra.mxu0 0.0
        %681 = vmatprep.subr.mxu0 0.0
        %682 = vmatpush1.xpose.msra.mxu0 0.0
        %683 = vmatprep.subr.mxu0 0.0
        %684 = vmatpush1.xpose.msra.mxu0 0.0
        %685 = vmatprep.subr.mxu0 0.0
        %686 = vmatpush1.xpose.msra.mxu0 0.0
        %687 = vmatprep.subr.mxu0 0.0
        %688 = vmatpush1.xpose.msra.mxu0 0.0
        %689 = vmatprep.subr.mxu0 0.0
        %690 = vmatpush1.xpose.msra.mxu0 0.0
        %691 = vmatprep.subr.mxu0 0.0
        %692 = vmatpush1.xpose.msra.mxu0 0.0
        %693 = vmatprep.subr.mxu0 0.0
        %694 = vmatpush1.xpose.msra.mxu0 0.0
        %695 = vmatprep.subr.mxu0 0.0
        %696 = vmatpush1.xpose.msra.mxu0 0.0
        %697 = vmatprep.subr.mxu0 0.0
        %698 = vmatpush1.xpose.msra.mxu0 0.0
        %699 = vmatprep.subr.mxu0 0.0
        %700 = vmatpush1.xpose.msra.mxu0 0.0
        %701 = vmatprep.subr.mxu0 0.0
        %702 = vmatpush1.xpose.msra.mxu0 0.0
        %703 = vmatprep.subr.mxu0 0.0
        %704 = vmatpush1.xpose.msra.mxu0 0.0
        %705 = vmatprep.mubr.f32.mxu0 0.0
        %706 = vmatmul.mubr.f32.gmra.mrb[0].mxu0 %v637
        %v707 = vpop.f32.mrb[0].mxu0
        %v708 = vadd.f32 0.0, %v707
        %v709 = vpop.f32.mrb[0].mxu0
        %710 = vdwg.mxu0
        %v711 = vld [vmem:[%s312] sm:$0xff]
        %v712 = vmul.f32 %v711, %v480
        %v713 = vmul.f32 %v711, %v556
        %v714 = vmul.f32 %v711, %v632
        %v715 = vmul.f32 %v711, %v708
        %v716 = vsub.f32 1.0, %v711
        %v717 = vmul.f32 %v716, 10000.0
        %v718 = vsub.f32 %v712, %v717
        %v719 = vsub.f32 %v713, %v717
        %v720 = vsub.f32 %v714, %v717
        %v721 = vsub.f32 %v715, %v717
        %v722 = vmul.f32 %v718, 0.03125
        %v723 = vmul.f32 %v719, 0.03125
        %v724 = vmul.f32 %v720, 0.03125
        %v725 = vmul.f32 %v721, 0.03125
        %v726 = vsel %vm408, %v722, -inf
        %727 = vmax.xlane.f32.xlu0 %v726
        %v728 = vpop.xlane.xlu0 %727
        %v729 = vsel %vm408, %v723, -inf
        %730 = vmax.xlane.f32.xlu0 %v729
        %v731 = vpop.xlane.xlu0 %730
        %v732 = vsel %vm408, %v724, -inf
        %733 = vmax.xlane.f32.xlu0 %v732
        %v734 = vpop.xlane.xlu0 %733
        %v735 = vsel %vm408, %v725, -inf
        %736 = vmax.xlane.f32.xlu0 %v735
        %v737 = vpop.xlane.xlu0 %736
        %v738 = vrot.slane %v728, 4
        %v739 = vmax.f32 %v728, %v738
        %v740 = vrot.slane %v739, 2
        %v741 = vmax.f32 %v739, %v740
        %v742 = vrot.slane %v741, 1
        %v743 = vmax.f32 %v741, %v742
        %v744 = vrot.slane %v731, 4
        %v745 = vmax.f32 %v731, %v744
        %v746 = vrot.slane %v745, 2
        %v747 = vmax.f32 %v745, %v746
        %v748 = vrot.slane %v747, 1
        %v749 = vmax.f32 %v747, %v748
        %v750 = vrot.slane %v734, 4
        %v751 = vmax.f32 %v734, %v750
        %v752 = vrot.slane %v751, 2
        %v753 = vmax.f32 %v751, %v752
        %v754 = vrot.slane %v753, 1
        %v755 = vmax.f32 %v753, %v754
        %v756 = vrot.slane %v737, 4
        %v757 = vmax.f32 %v737, %v756
        %v758 = vrot.slane %v757, 2
        %v759 = vmax.f32 %v757, %v758
        %v760 = vrot.slane %v759, 1
        %v761 = vmax.f32 %v759, %v760
        %v762 = vsub.f32 %v722, %v743
        %v763 = vsub.f32 %v723, %v749
        %v764 = vsub.f32 %v724, %v755
        %v765 = vsub.f32 %v725, %v761
        %v766 = vmul.f32 %v762, 32.0
        %v767 = vmul.f32 %v763, 32.0
        %v768 = vmul.f32 %v764, 32.0
        %v769 = vmul.f32 %v765, 32.0
        %v770 = vsel %vm408, %v766, -inf
        %771 = vmax.xlane.f32.xlu0 %v770
        %v772 = vpop.xlane.xlu0 %771
        %v773 = vsel %vm408, %v767, -inf
        %774 = vmax.xlane.f32.xlu0 %v773
        %v775 = vpop.xlane.xlu0 %774
        %v776 = vsel %vm408, %v768, -inf
        %777 = vmax.xlane.f32.xlu0 %v776
        %v778 = vpop.xlane.xlu0 %777
        %v779 = vsel %vm408, %v769, -inf
        %780 = vmax.xlane.f32.xlu0 %v779
        %v781 = vpop.xlane.xlu0 %780
        %v782 = vsub.f32 %v766, %v772
        %v783 = vsub.f32 %v767, %v775
        %v784 = vsub.f32 %v768, %v778
        %v785 = vsub.f32 %v769, %v781
        %v786 = vmul.f32 %v782, 1.442695
        %v787 = vpow.pop %v786
        %v788 = vmul.f32 %v783, 1.442695
        %v789 = vpow.pop %v788
        %v790 = vmul.f32 %v784, 1.442695
        %v791 = vpow.pop %v790
        %v792 = vmul.f32 %v785, 1.442695
        %v793 = vpow.pop %v792
        %v794 = vsel %vm408, %v787, 0.0
        %795 = vadd.xlane.f32.xlu0 %v794
        %v796 = vpop.xlane.xlu0 %795
        %v797 = vsel %vm408, %v789, 0.0
        %798 = vadd.xlane.f32.xlu0 %v797
        %v799 = vpop.xlane.xlu0 %798
        %v800 = vsel %vm408, %v791, 0.0
        %801 = vadd.xlane.f32.xlu0 %v800
        %v802 = vpop.xlane.xlu0 %801
        %v803 = vsel %vm408, %v793, 0.0
        %804 = vadd.xlane.f32.xlu0 %v803
        %v805 = vpop.xlane.xlu0 %804
        %v806 = vrcp.pop %v796
        %v807 = vmul.f32 %v787, %v806
        %v808 = vrcp.pop %v799
        %v809 = vmul.f32 %v789, %v808
        %v810 = vrcp.pop %v802
        %v811 = vmul.f32 %v791, %v810
        %v812 = vrcp.pop %v805
        %v813 = vmul.f32 %v793, %v812
        %814 = vrot.lane.b32.xlu0 %v396, 64
        %v815 = vpop.permute.xlu0 %814
        %v818 = vsel %vm408, %v807, 0
        %820 = vmatprep.subr.mxu0 0.0
        %821 = vmatpush1.msra.mxu0 %v815
        %822 = vmatprep.subr.mxu0 0.0
        %823 = vmatpush1.msra.mxu0 0.0
        %824 = vmatprep.subr.mxu0 0.0
        %825 = vmatpush1.msra.mxu0 0.0
        %826 = vmatprep.subr.mxu0 0.0
        %827 = vmatpush1.msra.mxu0 0.0
        %828 = vmatprep.subr.mxu0 0.0
        %829 = vmatpush1.msra.mxu0 0.0
        %830 = vmatprep.subr.mxu0 0.0
        %831 = vmatpush1.msra.mxu0 0.0
        %832 = vmatprep.subr.mxu0 0.0
        %833 = vmatpush1.msra.mxu0 0.0
        %834 = vmatprep.subr.mxu0 0.0
        %835 = vmatpush1.msra.mxu0 0.0
        %836 = vmatprep.subr.mxu0 0.0
        %837 = vmatpush1.msra.mxu0 0.0
        %838 = vmatprep.subr.mxu0 0.0
        %839 = vmatpush1.msra.mxu0 0.0
        %840 = vmatprep.subr.mxu0 0.0
        %841 = vmatpush1.msra.mxu0 0.0
        %842 = vmatprep.subr.mxu0 0.0
        %843 = vmatpush1.msra.mxu0 0.0
        %844 = vmatprep.subr.mxu0 0.0
        %845 = vmatpush1.msra.mxu0 0.0
        %846 = vmatprep.subr.mxu0 0.0
        %847 = vmatpush1.msra.mxu0 0.0
        %848 = vmatprep.subr.mxu0 0.0
        %849 = vmatpush1.msra.mxu0 0.0
        %850 = vmatprep.subr.mxu0 0.0
        %851 = vmatpush1.msra.mxu0 0.0
        %852 = vmatprep.subr.mxu0 0.0
        %853 = vmatpush1.msra.mxu0 0.0
        %854 = vmatprep.subr.mxu0 0.0
        %855 = vmatpush1.msra.mxu0 0.0
        %856 = vmatprep.subr.mxu0 0.0
        %857 = vmatpush1.msra.mxu0 0.0
        %858 = vmatprep.subr.mxu0 0.0
        %859 = vmatpush1.msra.mxu0 0.0
        %860 = vmatprep.subr.mxu0 0.0
        %861 = vmatpush1.msra.mxu0 0.0
        %862 = vmatprep.subr.mxu0 0.0
        %863 = vmatpush1.msra.mxu0 0.0
        %864 = vmatprep.subr.mxu0 0.0
        %865 = vmatpush1.msra.mxu0 0.0
        %866 = vmatprep.subr.mxu0 0.0
        %867 = vmatpush1.msra.mxu0 0.0
        %868 = vmatprep.subr.mxu0 0.0
        %869 = vmatpush1.msra.mxu0 0.0
        %870 = vmatprep.subr.mxu0 0.0
        %871 = vmatpush1.msra.mxu0 0.0
        %872 = vmatprep.subr.mxu0 0.0
        %873 = vmatpush1.msra.mxu0 0.0
        %874 = vmatprep.subr.mxu0 0.0
        %875 = vmatpush1.msra.mxu0 0.0
        %876 = vmatprep.subr.mxu0 0.0
        %877 = vmatpush1.msra.mxu0 0.0
        %878 = vmatprep.subr.mxu0 0.0
        %879 = vmatpush1.msra.mxu0 0.0
        %880 = vmatprep.subr.mxu0 0.0
        %881 = vmatpush1.msra.mxu0 0.0
        %882 = vmatprep.subr.mxu0 0.0
        %883 = vmatpush1.msra.mxu0 0.0
        %884 = vmatprep.mubr.f32.mxu0 0.0
        %885 = vmatmul.mubr.f32.gmra.mrb[0].mxu0 %v818
        %v886 = vpop.f32.mrb[0].mxu0
        %v887 = vadd.f32 0.0, %v886
        %v888 = vpop.f32.mrb[0].mxu0
        %889 = vdwg.mxu0
        %890 = vrot.lane.b32.xlu0 %v401, 64
        %v891 = vpop.permute.xlu0 %890
        %v894 = vsel %vm408, %v809, 0
        %896 = vmatprep.subr.mxu0 0.0
        %897 = vmatpush1.msra.mxu0 %v891
        %898 = vmatprep.subr.mxu0 0.0
        %899 = vmatpush1.msra.mxu0 0.0
        %900 = vmatprep.subr.mxu0 0.0
        %901 = vmatpush1.msra.mxu0 0.0
        %902 = vmatprep.subr.mxu0 0.0
        %903 = vmatpush1.msra.mxu0 0.0
        %904 = vmatprep.subr.mxu0 0.0
        %905 = vmatpush1.msra.mxu0 0.0
        %906 = vmatprep.subr.mxu0 0.0
        %907 = vmatpush1.msra.mxu0 0.0
        %908 = vmatprep.subr.mxu0 0.0
        %909 = vmatpush1.msra.mxu0 0.0
        %910 = vmatprep.subr.mxu0 0.0
        %911 = vmatpush1.msra.mxu0 0.0
        %912 = vmatprep.subr.mxu0 0.0
        %913 = vmatpush1.msra.mxu0 0.0
        %914 = vmatprep.subr.mxu0 0.0
        %915 = vmatpush1.msra.mxu0 0.0
        %916 = vmatprep.subr.mxu0 0.0
        %917 = vmatpush1.msra.mxu0 0.0
        %918 = vmatprep.subr.mxu0 0.0
        %919 = vmatpush1.msra.mxu0 0.0
        %920 = vmatprep.subr.mxu0 0.0
        %921 = vmatpush1.msra.mxu0 0.0
        %922 = vmatprep.subr.mxu0 0.0
        %923 = vmatpush1.msra.mxu0 0.0
        %924 = vmatprep.subr.mxu0 0.0
        %925 = vmatpush1.msra.mxu0 0.0
        %926 = vmatprep.subr.mxu0 0.0
        %927 = vmatpush1.msra.mxu0 0.0
        %928 = vmatprep.subr.mxu0 0.0
        %929 = vmatpush1.msra.mxu0 0.0
        %930 = vmatprep.subr.mxu0 0.0
        %931 = vmatpush1.msra.mxu0 0.0
        %932 = vmatprep.subr.mxu0 0.0
        %933 = vmatpush1.msra.mxu0 0.0
        %934 = vmatprep.subr.mxu0 0.0
        %935 = vmatpush1.msra.mxu0 0.0
        %936 = vmatprep.subr.mxu0 0.0
        %937 = vmatpush1.msra.mxu0 0.0
        %938 = vmatprep.subr.mxu0 0.0
        %939 = vmatpush1.msra.mxu0 0.0
        %940 = vmatprep.subr.mxu0 0.0
        %941 = vmatpush1.msra.mxu0 0.0
        %942 = vmatprep.subr.mxu0 0.0
        %943 = vmatpush1.msra.mxu0 0.0
        %944 = vmatprep.subr.mxu0 0.0
        %945 = vmatpush1.msra.mxu0 0.0
        %946 = vmatprep.subr.mxu0 0.0
        %947 = vmatpush1.msra.mxu0 0.0
        %948 = vmatprep.subr.mxu0 0.0
        %949 = vmatpush1.msra.mxu0 0.0
        %950 = vmatprep.subr.mxu0 0.0
        %951 = vmatpush1.msra.mxu0 0.0
        %952 = vmatprep.subr.mxu0 0.0
        %953 = vmatpush1.msra.mxu0 0.0
        %954 = vmatprep.subr.mxu0 0.0
        %955 = vmatpush1.msra.mxu0 0.0
        %956 = vmatprep.subr.mxu0 0.0
        %957 = vmatpush1.msra.mxu0 0.0
        %958 = vmatprep.subr.mxu0 0.0
        %959 = vmatpush1.msra.mxu0 0.0
        %960 = vmatprep.mubr.f32.mxu0 0.0
        %961 = vmatmul.mubr.f32.gmra.mrb[0].mxu0 %v894
        %v962 = vpop.f32.mrb[0].mxu0
        %v963 = vadd.f32 0.0, %v962
        %v964 = vpop.f32.mrb[0].mxu0
        %965 = vdwg.mxu0
        %966 = vrot.lane.b32.xlu0 %v403, 64
        %v967 = vpop.permute.xlu0 %966
        %v970 = vsel %vm408, %v811, 0
        %972 = vmatprep.subr.mxu0 0.0
        %973 = vmatpush1.msra.mxu0 %v967
        %974 = vmatprep.subr.mxu0 0.0
        %975 = vmatpush1.msra.mxu0 0.0
        %976 = vmatprep.subr.mxu0 0.0
        %977 = vmatpush1.msra.mxu0 0.0
        %978 = vmatprep.subr.mxu0 0.0
        %979 = vmatpush1.msra.mxu0 0.0
        %980 = vmatprep.subr.mxu0 0.0
        %981 = vmatpush1.msra.mxu0 0.0
        %982 = vmatprep.subr.mxu0 0.0
        %983 = vmatpush1.msra.mxu0 0.0
        %984 = vmatprep.subr.mxu0 0.0
        %985 = vmatpush1.msra.mxu0 0.0
        %986 = vmatprep.subr.mxu0 0.0
        %987 = vmatpush1.msra.mxu0 0.0
        %988 = vmatprep.subr.mxu0 0.0
        %989 = vmatpush1.msra.mxu0 0.0
        %990 = vmatprep.subr.mxu0 0.0
        %991 = vmatpush1.msra.mxu0 0.0
        %992 = vmatprep.subr.mxu0 0.0
        %993 = vmatpush1.msra.mxu0 0.0
        %994 = vmatprep.subr.mxu0 0.0
        %995 = vmatpush1.msra.mxu0 0.0
        %996 = vmatprep.subr.mxu0 0.0
        %997 = vmatpush1.msra.mxu0 0.0
        %998 = vmatprep.subr.mxu0 0.0
        %999 = vmatpush1.msra.mxu0 0.0
        %1000 = vmatprep.subr.mxu0 0.0
        %1001 = vmatpush1.msra.mxu0 0.0
        %1002 = vmatprep.subr.mxu0 0.0
        %1003 = vmatpush1.msra.mxu0 0.0
        %1004 = vmatprep.subr.mxu0 0.0
        %1005 = vmatpush1.msra.mxu0 0.0
        %1006 = vmatprep.subr.mxu0 0.0
        %1007 = vmatpush1.msra.mxu0 0.0
        %1008 = vmatprep.subr.mxu0 0.0
        %1009 = vmatpush1.msra.mxu0 0.0
        %1010 = vmatprep.subr.mxu0 0.0
        %1011 = vmatpush1.msra.mxu0 0.0
        %1012 = vmatprep.subr.mxu0 0.0
        %1013 = vmatpush1.msra.mxu0 0.0
        %1014 = vmatprep.subr.mxu0 0.0
        %1015 = vmatpush1.msra.mxu0 0.0
        %1016 = vmatprep.subr.mxu0 0.0
        %1017 = vmatpush1.msra.mxu0 0.0
        %1018 = vmatprep.subr.mxu0 0.0
        %1019 = vmatpush1.msra.mxu0 0.0
        %1020 = vmatprep.subr.mxu0 0.0
        %1021 = vmatpush1.msra.mxu0 0.0
        %1022 = vmatprep.subr.mxu0 0.0
        %1023 = vmatpush1.msra.mxu0 0.0
        %1024 = vmatprep.subr.mxu0 0.0
        %1025 = vmatpush1.msra.mxu0 0.0
        %1026 = vmatprep.subr.mxu0 0.0
        %1027 = vmatpush1.msra.mxu0 0.0
        %1028 = vmatprep.subr.mxu0 0.0
        %1029 = vmatpush1.msra.mxu0 0.0
        %1030 = vmatprep.subr.mxu0 0.0
        %1031 = vmatpush1.msra.mxu0 0.0
        %1032 = vmatprep.subr.mxu0 0.0
        %1033 = vmatpush1.msra.mxu0 0.0
        %1034 = vmatprep.subr.mxu0 0.0
        %1035 = vmatpush1.msra.mxu0 0.0
        %1036 = vmatprep.mubr.f32.mxu0 0.0
        %1037 = vmatmul.mubr.f32.gmra.mrb[0].mxu0 %v970
        %v1038 = vpop.f32.mrb[0].mxu0
        %v1039 = vadd.f32 0.0, %v1038
        %v1040 = vpop.f32.mrb[0].mxu0
        %1041 = vdwg.mxu0
        %1042 = vrot.lane.b32.xlu0 %v405, 64
        %v1043 = vpop.permute.xlu0 %1042
        %v1046 = vsel %vm408, %v813, 0
        %1048 = vmatprep.subr.mxu0 0.0
        %1049 = vmatpush1.msra.mxu0 %v1043
        %1050 = vmatprep.subr.mxu0 0.0
        %1051 = vmatpush1.msra.mxu0 0.0
        %1052 = vmatprep.subr.mxu0 0.0
        %1053 = vmatpush1.msra.mxu0 0.0
        %1054 = vmatprep.subr.mxu0 0.0
        %1055 = vmatpush1.msra.mxu0 0.0
        %1056 = vmatprep.subr.mxu0 0.0
        %1057 = vmatpush1.msra.mxu0 0.0
        %1058 = vmatprep.subr.mxu0 0.0
        %1059 = vmatpush1.msra.mxu0 0.0
        %1060 = vmatprep.subr.mxu0 0.0
        %1061 = vmatpush1.msra.mxu0 0.0
        %1062 = vmatprep.subr.mxu0 0.0
        %1063 = vmatpush1.msra.mxu0 0.0
        %1064 = vmatprep.subr.mxu0 0.0
        %1065 = vmatpush1.msra.mxu0 0.0
        %1066 = vmatprep.subr.mxu0 0.0
        %1067 = vmatpush1.msra.mxu0 0.0
        %1068 = vmatprep.subr.mxu0 0.0
        %1069 = vmatpush1.msra.mxu0 0.0
        %1070 = vmatprep.subr.mxu0 0.0
        %1071 = vmatpush1.msra.mxu0 0.0
        %1072 = vmatprep.subr.mxu0 0.0
        %1073 = vmatpush1.msra.mxu0 0.0
        %1074 = vmatprep.subr.mxu0 0.0
        %1075 = vmatpush1.msra.mxu0 0.0
        %1076 = vmatprep.subr.mxu0 0.0
        %1077 = vmatpush1.msra.mxu0 0.0
        %1078 = vmatprep.subr.mxu0 0.0
        %1079 = vmatpush1.msra.mxu0 0.0
        %1080 = vmatprep.subr.mxu0 0.0
        %1081 = vmatpush1.msra.mxu0 0.0
        %1082 = vmatprep.subr.mxu0 0.0
        %1083 = vmatpush1.msra.mxu0 0.0
        %1084 = vmatprep.subr.mxu0 0.0
        %1085 = vmatpush1.msra.mxu0 0.0
        %1086 = vmatprep.subr.mxu0 0.0
        %1087 = vmatpush1.msra.mxu0 0.0
        %1088 = vmatprep.subr.mxu0 0.0
        %1089 = vmatpush1.msra.mxu0 0.0
        %1090 = vmatprep.subr.mxu0 0.0
        %1091 = vmatpush1.msra.mxu0 0.0
        %1092 = vmatprep.subr.mxu0 0.0
        %1093 = vmatpush1.msra.mxu0 0.0
        %1094 = vmatprep.subr.mxu0 0.0
        %1095 = vmatpush1.msra.mxu0 0.0
        %1096 = vmatprep.subr.mxu0 0.0
        %1097 = vmatpush1.msra.mxu0 0.0
        %1098 = vmatprep.subr.mxu0 0.0
        %1099 = vmatpush1.msra.mxu0 0.0
        %1100 = vmatprep.subr.mxu0 0.0
        %1101 = vmatpush1.msra.mxu0 0.0
        %1102 = vmatprep.subr.mxu0 0.0
        %1103 = vmatpush1.msra.mxu0 0.0
        %1104 = vmatprep.subr.mxu0 0.0
        %1105 = vmatpush1.msra.mxu0 0.0
        %1106 = vmatprep.subr.mxu0 0.0
        %1107 = vmatpush1.msra.mxu0 0.0
        %1108 = vmatprep.subr.mxu0 0.0
        %1109 = vmatpush1.msra.mxu0 0.0
        %1110 = vmatprep.subr.mxu0 0.0
        %1111 = vmatpush1.msra.mxu0 0.0
        %1112 = vmatprep.mubr.f32.mxu0 0.0
        %1113 = vmatmul.mubr.f32.gmra.mrb[0].mxu0 %v1046
        %v1114 = vpop.f32.mrb[0].mxu0
        %v1115 = vadd.f32 0.0, %v1114
        %v1116 = vpop.f32.mrb[0].mxu0
        %1117 = vdwg.mxu0
        %1119 = vrot.lane.b32.xlu0 %v963, 8
        %v1120 = vpop.permute.xlu0 %1119
        %1123 = vrot.lane.b32.xlu0 %v1039, 16
        %v1124 = vpop.permute.xlu0 %1123
        %1127 = vrot.lane.b32.xlu0 %v1115, 24
        %v1128 = vpop.permute.xlu0 %1127
        %v1130 = vsel %vm408, %v887, %v1120
        %vm1131 = vcmask 130048
        %v1132 = vsel %vm1131, %v1130, %v1124
        %vm1133 = vcmask 195584
        %v1134 = vsel %vm1133, %v1132, %v1128
        %v1135 = vld [vmem:[#allocation7] sm:$0xff]
        %v1136 = vld [vmem:[#allocation7 + $0x8] sm:$0xff]
        %v1137 = vld [vmem:[#allocation7 + $0x10] sm:$0xff]
        %v1138 = vld [vmem:[#allocation7 + $0x18] sm:$0xff]
        %v1139 = vld [vmem:[%s4] sm:$0x1]
        %v1141 = vlaneseq
        %v1142 = vshrl.u32 %v1141, 7
        %v1143 = vsub.s32 0, %v1142
        %v1144 = vrot.slane %v1139, %v1143
        %v1147 = vsel %vm325, %v1134, 0
        %1149 = vmatprep.subr.mxu0 0.0
        %1150 = vmatpush1.msra.mxu0 %v1135
        %1151 = vmatprep.subr.mxu0 0.0
        %1152 = vmatpush1.msra.mxu0 %v1136
        %1153 = vmatprep.subr.mxu0 0.0
        %1154 = vmatpush1.msra.mxu0 %v1137
        %1155 = vmatprep.subr.mxu0 0.0
        %1156 = vmatpush1.msra.mxu0 %v1138
        %1157 = vmatprep.subr.mxu0 0.0
        %1158 = vmatpush1.msra.mxu0 0.0
        %1159 = vmatprep.subr.mxu0 0.0
        %1160 = vmatpush1.msra.mxu0 0.0
        %1161 = vmatprep.subr.mxu0 0.0
        %1162 = vmatpush1.msra.mxu0 0.0
        %1163 = vmatprep.subr.mxu0 0.0
        %1164 = vmatpush1.msra.mxu0 0.0
        %1165 = vmatprep.subr.mxu0 0.0
        %1166 = vmatpush1.msra.mxu0 0.0
        %1167 = vmatprep.subr.mxu0 0.0
        %1168 = vmatpush1.msra.mxu0 0.0
        %1169 = vmatprep.subr.mxu0 0.0
        %1170 = vmatpush1.msra.mxu0 0.0
        %1171 = vmatprep.subr.mxu0 0.0
        %1172 = vmatpush1.msra.mxu0 0.0
        %1173 = vmatprep.subr.mxu0 0.0
        %1174 = vmatpush1.msra.mxu0 0.0
        %1175 = vmatprep.subr.mxu0 0.0
        %1176 = vmatpush1.msra.mxu0 0.0
        %1177 = vmatprep.subr.mxu0 0.0
        %1178 = vmatpush1.msra.mxu0 0.0
        %1179 = vmatprep.subr.mxu0 0.0
        %1180 = vmatpush1.msra.mxu0 0.0
        %1181 = vmatprep.subr.mxu0 0.0
        %1182 = vmatpush1.msra.mxu0 0.0
        %1183 = vmatprep.subr.mxu0 0.0
        %1184 = vmatpush1.msra.mxu0 0.0
        %1185 = vmatprep.subr.mxu0 0.0
        %1186 = vmatpush1.msra.mxu0 0.0
        %1187 = vmatprep.subr.mxu0 0.0
        %1188 = vmatpush1.msra.mxu0 0.0
        %1189 = vmatprep.subr.mxu0 0.0
        %1190 = vmatpush1.msra.mxu0 0.0
        %1191 = vmatprep.subr.mxu0 0.0
        %1192 = vmatpush1.msra.mxu0 0.0
        %1193 = vmatprep.subr.mxu0 0.0
        %1194 = vmatpush1.msra.mxu0 0.0
        %1195 = vmatprep.subr.mxu0 0.0
        %1196 = vmatpush1.msra.mxu0 0.0
        %1197 = vmatprep.subr.mxu0 0.0
        %1198 = vmatpush1.msra.mxu0 0.0
        %1199 = vmatprep.subr.mxu0 0.0
        %1200 = vmatpush1.msra.mxu0 0.0
        %1201 = vmatprep.subr.mxu0 0.0
        %1202 = vmatpush1.msra.mxu0 0.0
        %1203 = vmatprep.subr.mxu0 0.0
        %1204 = vmatpush1.msra.mxu0 0.0
        %1205 = vmatprep.subr.mxu0 0.0
        %1206 = vmatpush1.msra.mxu0 0.0
        %1207 = vmatprep.subr.mxu0 0.0
        %1208 = vmatpush1.msra.mxu0 0.0
        %1209 = vmatprep.subr.mxu0 0.0
        %1210 = vmatpush1.msra.mxu0 0.0
        %1211 = vmatprep.subr.mxu0 0.0
        %1212 = vmatpush1.msra.mxu0 0.0
        %1213 = vmatprep.mubr.f32.mxu0 0.0
        %1214 = vmatmul.mubr.f32.gmra.mrb[0].mxu0 %v1147
        %v1215 = vpop.f32.mrb[0].mxu0
        %v1216 = vadd.f32 %v1144, %v1215
        %v1217 = vpop.f32.mrb[0].mxu0
        %1218 = vdwg.mxu0
        %v1220 = vrot.slane %v1216, 2
        %1221 = vrot.lane.b32.xlu0 %v1220, 32
        %v1222 = vpop.permute.xlu0 %1221
        %v1224 = vrot.slane %v1216, 4
        %1225 = vrot.lane.b32.xlu0 %v1224, 64
        %v1226 = vpop.permute.xlu0 %1225
        %v1228 = vrot.slane %v1216, 6
        %1229 = vrot.lane.b32.xlu0 %v1228, 96
        %v1230 = vpop.permute.xlu0 %1229
        %v1232 = vsel %vm325, %v1216, %v1222
        %vm1233 = vcmask 523264
        %v1234 = vsel %vm1233, %v1232, %v1226
        %vm1235 = vcmask 785408
        %v1236 = vsel %vm1235, %v1234, %v1230
        %1237 = vst [vmem:[%s308] sm:$0x3] %v1236
        %s1238 = sand.u32 %s168, 1
        %s1239 = scalar_lea.sflag [#allocation4], %s1238
        %s1240 = sand.u32 %s168, 1
        %s1241 = smul.addr %s1240, 2
        %s1242 = scalar_lea.vmem [#allocation8], %s1241
        // Predicated region
        $region57: #{tpu_custom_call.1} parent=43 // pred_check
          %p1243 = pneg %p178
        $region58: #{tpu_custom_call.1} parent=43 // pred_check_branch
          %1245 = sbr.rel (%p1243) target = $region60
        $region59: #{tpu_custom_call.1} parent=43 // pred_region
          %s1247 = ssub.s32 32, 32
          %1248 = vsyncadd %s1239, %s1247
          %s1249 = smul.addr %s24, 32
          %s1250 = scalar_lea.hbm %s6, %s1249
          %s1252 = sshll.u32 %s1242, 4
          %s1253 = int_to_ptr.vmem [resolvable:$true] %s1252
          %1255 = dma.vmem_to_hbm [thread:$0]  %s1253, 32, %s1250, %s1239
        $region60: #{tpu_custom_call.1} parent=43 // pred_fallthru
          _
      $region44: #{tpu_custom_call.1} parent=5 // pred_fallthru
        _
      %p1256 = scmp.le.s32.totalorder 2, %s19
      // Predicated region
      $region61: #{tpu_custom_call.1} parent=5 // pred_check
        %p1257 = pneg %p1256
      $region62: #{tpu_custom_call.1} parent=5 // pred_check_branch
        %1259 = sbr.rel (%p1257) target = $region64
      $region63: #{tpu_custom_call.1} parent=5 // pred_region
        %s1260 = ssub.s32 %s19, 2
        // Predicated region
        $region65: #{tpu_custom_call.1} parent=63 // pred_check
          %p1261 = pneg %p184
        $region66: #{tpu_custom_call.1} parent=63 // pred_check_branch
          %1263 = sbr.rel (%p1261) target = $region68
        $region67: #{tpu_custom_call.1} parent=63 // pred_region
          %s1264 = sand.u32 %s169, 1
          %s1265 = scalar_lea.sflag [#allocation4], %s1264
          %s1266 = sand.u32 %s169, 1
          %s1267 = smul.addr %s1266, 2
          %s1268 = scalar_lea.vmem [#allocation8], %s1267
          %1269 = dma.done %s1265, 32
        $region68: #{tpu_custom_call.1} parent=63 // pred_fallthru
          _
      $region64: #{tpu_custom_call.1} parent=5 // pred_fallthru
        _
    $region6: #{tpu_custom_call.1} parent=1 // loop_footer
      %s23 = sadd.s32 1, %s19
    $region7: #{tpu_custom_call.1} parent=1 // loop_footer_branch
      %18 = sbr.rel target = $region3
    $region8: #{tpu_custom_call.1} parent=1 // loop_exit
      _
    %1270 = vsyncpa [#allocation3], 1
    %s1271 = scalar_lea.sflag [#allocation3], 1
    %1272 = vsyncpa %s1271, 1
    %1273 = vsyncpa [#allocation6], 1
    %1274 = vsyncpa [#allocation4], 1
    %s1275 = scalar_lea.sflag [#allocation4], 1
    %1276 = vsyncpa %s1275, 1

</llo_original>
